<compile_context>
chip_gen: v6e
topology: v6e:2x2x1
jax: 0.10.0
libtpu: 0.0.40
codegen_flags: <defaults>
</compile_context>

<pallas_src>
import functools

import jax
import jax.numpy as jnp
from jax.experimental import pallas as pl
from jax.experimental.pallas import tpu as pltpu

RESAMPLED_TO = 256       # input beat length
HIDDEN = 512
LATENT_DIM = 32          # opt.latent_dim (synthetic choice)
BN_EPS = 1e-5
LRELU_SLOPE = 0.2


def _leaky_relu(x, slope=LRELU_SLOPE):
    return jnp.where(x > 0, x, slope * x)


def _round_up(x, m):
    return ((x + m - 1) // m) * m


def _encoder_kernel(beat_ref, eps_ref,
                    w1_ref, w2_ref, whead_ref, vecs_ref, bhead_ref,
                    z_ref,
                    sum_ref, ssq_ref, scale_ref, shift_ref,
                    *, n_valid, tile_b):
    p = pl.program_id(0)          # 0: BN-stats pass, 1: apply pass
    j = pl.program_id(1)          # batch tile index

    vecs = vecs_ref[...]          # (3, HIDDEN) f32 : b1 | gamma | beta
    b1 = vecs[0:1, :]

    # ---- pre-BN stack (recomputed in both passes; MXU work is cheap) -------
    x = beat_ref[...].astype(jnp.bfloat16)
    h1 = jnp.dot(x, w1_ref[...], preferred_element_type=jnp.float32) + b1
    h1 = _leaky_relu(h1)
    # Linear(512,512) bias omitted: a constant pre-BN shift is cancelled
    # exactly by training-mode BatchNorm's batch-mean subtraction.
    h = jnp.dot(h1.astype(jnp.bfloat16), w2_ref[...],
                preferred_element_type=jnp.float32)

    # Padded rows (batch rounded up to tile_b) must not pollute the BN stats.
    if n_valid % tile_b == 0:
        hm = h
    else:
        row = jax.lax.broadcasted_iota(jnp.int32, (tile_b, 1), 0) + j * tile_b
        hm = jnp.where(row < n_valid, h, 0.0)

    @pl.when(p == 0)
    def _stats_pass():
        @pl.when(j == 0)
        def _():
            sum_ref[...] = jnp.zeros_like(sum_ref)
            ssq_ref[...] = jnp.zeros_like(ssq_ref)
        # single-traversal stats: sum and sum-of-squares, f32 accumulation
        sum_ref[...] += jnp.sum(hm, axis=0, keepdims=True)
        ssq_ref[...] += jnp.sum(hm * hm, axis=0, keepdims=True)

    @pl.when(p == 1)
    def _apply_pass():
        @pl.when(j == 0)
        def _():
            inv_n = jnp.float32(1.0 / n_valid)
            mean = sum_ref[...] * inv_n
            var = ssq_ref[...] * inv_n - mean * mean      # biased (training BN)
            gamma = vecs[1:2, :]
            beta = vecs[2:3, :]
            scale = gamma * jax.lax.rsqrt(var + BN_EPS)   # EUP slot
            scale_ref[...] = scale
            shift_ref[...] = beta - mean * scale
        hn = _leaky_relu(h * scale_ref[...] + shift_ref[...])
        heads = jnp.dot(hn.astype(jnp.bfloat16), whead_ref[...],
                        preferred_element_type=jnp.float32) + bhead_ref[...]
        mu = heads[:, :LATENT_DIM]
        logvar = heads[:, LATENT_DIM:2 * LATENT_DIM]
        std = jnp.exp(0.5 * logvar)
        z_ref[...] = eps_ref[...] * std + mu


def encoder_forward(beat, eps, params, *, tile_b=None, interpret=False):
    """beat: (B, 256) f32, eps: (B, LATENT_DIM) f32 N(0,1) noise.
    Returns z: (B, LATENT_DIM) f32.  BatchNorm uses full-batch statistics
    (training mode), computed in a first grid pass; VMEM use is bounded by the
    batch tile, so any B fits all TPU generations (incl. v7x's 64 MiB VMEM)."""
    B = beat.shape[0]
    assert beat.shape == (B, RESAMPLED_TO)
    assert eps.shape == (B, LATENT_DIM)
    w1, w2, whead, vecs, bhead = params

    if tile_b is None:
        # 128 rows = natural MXU granule on all generations; small batches are
        # just rounded up to a bf16-sublane-friendly multiple of 16.
        tile_b = 128 if B >= 128 else _round_up(B, 16)
    Bp = _round_up(B, tile_b)
    n_bt = Bp // tile_b

    if Bp != B:
        pad = ((0, Bp - B), (0, 0))
        beat_p = jnp.pad(beat, pad)
        eps_p = jnp.pad(eps, pad)
    else:
        beat_p, eps_p = beat, eps

    kernel = functools.partial(_encoder_kernel, n_valid=B, tile_b=tile_b)

    def const(shape):
        return pl.BlockSpec(shape, lambda p, j: (0,) * len(shape))

    flops = (2 * 2 * Bp * (RESAMPLED_TO * HIDDEN + HIDDEN * HIDDEN)   # 2 passes
             + 2 * Bp * HIDDEN * 2 * LATENT_DIM)                       # heads
    transcendentals = HIDDEN + Bp * LATENT_DIM                         # rsqrt+exp
    bytes_accessed = (2 * beat_p.size * 4 + eps_p.size * 4 + Bp * LATENT_DIM * 4
                      + sum(int(a.size) * a.dtype.itemsize for a in params))

    z_p = pl.pallas_call(
        kernel,
        out_shape=jax.ShapeDtypeStruct((Bp, LATENT_DIM), jnp.float32),
        grid_spec=pltpu.PrefetchScalarGridSpec(
            num_scalar_prefetch=0,
            grid=(2, n_bt),                       # (pass, batch tile)
            in_specs=[
                # beat tile needed in both passes
                pl.BlockSpec((tile_b, RESAMPLED_TO), lambda p, j: (j, 0)),
                # eps only needed in pass 1; p*j pins it to block 0 during
                # pass 0 so there is no wasted per-tile re-fetch.
                pl.BlockSpec((tile_b, LATENT_DIM), lambda p, j: (p * j, 0)),
                const((RESAMPLED_TO, HIDDEN)),        # w1   bf16
                const((HIDDEN, HIDDEN)),              # w2   bf16
                const((HIDDEN, 2 * LATENT_DIM)),      # fused head weight bf16
                const((3, HIDDEN)),                   # b1|gamma|beta  f32
                const((1, 2 * LATENT_DIM)),           # fused head bias f32
            ],
            # z is only written in pass 1; p*j keeps the block index constant
            # during pass 0 so no unwritten buffer is ever flushed to HBM.
            out_specs=pl.BlockSpec((tile_b, LATENT_DIM), lambda p, j: (p * j, 0)),
            scratch_shapes=[pltpu.VMEM((1, HIDDEN), jnp.float32)] * 4,
        ),
        compiler_params=pltpu.CompilerParams(
            dimension_semantics=("arbitrary", "arbitrary"),
            vmem_limit_bytes=16 << 20,   # tile-bounded footprint (~few MiB)
        ),
        cost_estimate=pl.CostEstimate(flops=flops,
                                      transcendentals=transcendentals,
                                      bytes_accessed=bytes_accessed),
        interpret=interpret,
    )(beat_p, eps_p, w1, w2, whead, vecs, bhead)

    return z_p[:B]


def init_params(key):
    """Deterministic synthetic params (PyTorch-style uniform fan-in init),
    packed into the kernel-ready layout: bf16 matmul weights, fused head
    weight/bias, and one (3,512) f32 array holding b1 | gamma | beta."""
    ks = jax.random.split(key, 8)

    def linear(kw, kb, fan_in, fan_out):
        bound = 1.0 / (fan_in ** 0.5)
        w = jax.random.uniform(kw, (fan_in, fan_out), jnp.float32, -bound, bound)
        b = jax.random.uniform(kb, (fan_out,), jnp.float32, -bound, bound)
        return w, b

    w1, b1 = linear(ks[0], ks[1], RESAMPLED_TO, HIDDEN)
    w2, _b2 = linear(ks[2], ks[3], HIDDEN, HIDDEN)   # b2 cancelled by BN mean
    wmu, bmu = linear(ks[4], ks[5], HIDDEN, LATENT_DIM)
    wlv, blv = linear(ks[6], ks[7], HIDDEN, LATENT_DIM)
    gamma = jnp.ones((HIDDEN,), jnp.float32)          # BatchNorm1d weight
    beta = jnp.zeros((HIDDEN,), jnp.float32)          # BatchNorm1d bias

    whead = jnp.concatenate([wmu, wlv], axis=1).astype(jnp.bfloat16)  # (512, 64)
    bhead = jnp.concatenate([bmu, blv])[None, :]                       # (1, 64)
    vecs = jnp.stack([b1, gamma, beta], axis=0)                        # (3, 512)
    return (w1.astype(jnp.bfloat16), w2.astype(jnp.bfloat16), whead, vecs, bhead)


def encoder_reference(beat, eps, params):
    """Pure-JAX reference mirroring the kernel numerics (bf16 matmul operands,
    f32 accumulation, training-mode BN with biased variance)."""
    w1, w2, whead, vecs, bhead = params
    b1, gamma, beta = vecs[0:1], vecs[1:2], vecs[2:3]
    h = jnp.dot(beat.astype(jnp.bfloat16), w1,
                preferred_element_type=jnp.float32) + b1
    h = _leaky_relu(h)
    h = jnp.dot(h.astype(jnp.bfloat16), w2, preferred_element_type=jnp.float32)
    mean = jnp.mean(h, axis=0, keepdims=True)
    var = jnp.mean(h * h, axis=0, keepdims=True) - mean * mean
    h = (h - mean) * (gamma * jax.lax.rsqrt(var + BN_EPS)) + beta
    h = _leaky_relu(h)
    heads = jnp.dot(h.astype(jnp.bfloat16), whead,
                    preferred_element_type=jnp.float32) + bhead
    mu = heads[:, :LATENT_DIM]
    logvar = heads[:, LATENT_DIM:]
    return eps * jnp.exp(0.5 * logvar) + mu


if __name__ == "__main__":
    key = jax.random.PRNGKey(0)
    kb, ke, kp = jax.random.split(key, 3)

    B = 8   # small demo batch; larger B amortises the ~0.8 MiB weight stream
    beat = jax.random.normal(kb, (B, RESAMPLED_TO), jnp.float32)
    eps = jax.random.normal(ke, (B, LATENT_DIM), jnp.float32)
    params = init_params(kp)

    z = encoder_forward(beat, eps, params)
    jax.block_until_ready(z)

    assert z.shape == (B, LATENT_DIM)
    assert z.dtype == jnp.float32
    assert bool(jnp.isfinite(z).all())

    z_ref = encoder_reference(beat, eps, params)
    max_err = float(jnp.max(jnp.abs(z - z_ref)))
    assert max_err < 5e-2, f"max |z - z_ref| = {max_err}"

    print("KERNEL_OK")
</pallas_src>

<mosaic_0001>
module attributes {stable_mosaic.version = 11 : i64} {
  func.func @_encoder_kernel(%arg0: i32, %arg1: i32, %arg2: memref<16x256xf32, #tpu.memory_space<vmem>>, %arg3: memref<16x32xf32, #tpu.memory_space<vmem>>, %arg4: memref<256x512xbf16, #tpu.memory_space<vmem>>, %arg5: memref<512x512xbf16, #tpu.memory_space<vmem>>, %arg6: memref<512x64xbf16, #tpu.memory_space<vmem>>, %arg7: memref<3x512xf32, #tpu.memory_space<vmem>>, %arg8: memref<1x64xf32, #tpu.memory_space<vmem>>, %arg9: memref<16x32xf32, #tpu.memory_space<vmem>>, %arg10: memref<1x512xf32, #tpu.memory_space<vmem>>, %arg11: memref<1x512xf32, #tpu.memory_space<vmem>>, %arg12: memref<1x512xf32, #tpu.memory_space<vmem>>, %arg13: memref<1x512xf32, #tpu.memory_space<vmem>>) attributes {dimension_semantics = [#tpu.dimension_semantics<arbitrary>, #tpu.dimension_semantics<arbitrary>], iteration_bounds = array<i64: 2, 1>, scalar_prefetch = 0 : i64, scratch_operands = 4 : i64, tpu.core_type = #tpu.core_type<tc>, window_params = [{transform_indices = @transform_0, window_bounds = array<i64: 16, 256>}, {transform_indices = @transform_1, window_bounds = array<i64: 16, 32>}, {pipeline_mode = #tpu.pipeline_mode<synchronous>, transform_indices = @transform_2, window_bounds = array<i64: 256, 512>}, {pipeline_mode = #tpu.pipeline_mode<synchronous>, transform_indices = @transform_3, window_bounds = array<i64: 512, 512>}, {pipeline_mode = #tpu.pipeline_mode<synchronous>, transform_indices = @transform_4, window_bounds = array<i64: 512, 64>}, {pipeline_mode = #tpu.pipeline_mode<synchronous>, transform_indices = @transform_5, window_bounds = array<i64: 3, 512>}, {pipeline_mode = #tpu.pipeline_mode<synchronous>, transform_indices = @transform_6, window_bounds = array<i64: 1, 64>}, {transform_indices = @transform_7, window_bounds = array<i64: 16, 32>}]} {
    %c0 = arith.constant 0 : index
    %c0_0 = arith.constant 0 : index
    %0 = vector.load %arg7[%c0, %c0_0] : memref<3x512xf32, #tpu.memory_space<vmem>>, vector<3x512xf32>
    %1 = vector.extract_strided_slice %0 {offsets = [0, 0], sizes = [1, 512], strides = [1, 1]} : vector<3x512xf32> to vector<1x512xf32>
    %c0_1 = arith.constant 0 : index
    %c0_2 = arith.constant 0 : index
    %2 = vector.load %arg2[%c0_1, %c0_2] : memref<16x256xf32, #tpu.memory_space<vmem>>, vector<16x256xf32>
    %3 = arith.truncf %2 : vector<16x256xf32> to vector<16x256xbf16>
    %c0_3 = arith.constant 0 : index
    %c0_4 = arith.constant 0 : index
    %4 = vector.load %arg4[%c0_3, %c0_4] : memref<256x512xbf16, #tpu.memory_space<vmem>>, vector<256x512xbf16>
    %cst = arith.constant dense<0.000000e+00> : vector<16x512xf32>
    %5 = tpu.matmul %3, %4, %cst {dimension_numbers = #tpu.dot_dimension_numbers<[1], [0], [0], [1], [0, 0, 1, 1], [], []>} : vector<16x256xbf16>, vector<256x512xbf16>, vector<16x512xf32> -> vector<16x512xf32>
    %6 = vector.broadcast %1 : vector<1x512xf32> to vector<16x512xf32>
    %7 = arith.addf %5, %6 : vector<16x512xf32>
    %cst_5 = arith.constant 0.000000e+00 : f32
    %8 = vector.broadcast %cst_5 : f32 to vector<16x512xf32>
    %9 = arith.cmpf ogt, %7, %8 : vector<16x512xf32>
    %cst_6 = arith.constant 2.000000e-01 : f32
    %10 = vector.broadcast %cst_6 : f32 to vector<16x512xf32>
    %11 = arith.mulf %10, %7 : vector<16x512xf32>
    %12 = arith.select %9, %7, %11 : vector<16x512xi1>, vector<16x512xf32>
    %13 = arith.truncf %12 : vector<16x512xf32> to vector<16x512xbf16>
    %c0_7 = arith.constant 0 : index
    %c0_8 = arith.constant 0 : index
    %14 = vector.load %arg5[%c0_7, %c0_8] : memref<512x512xbf16, #tpu.memory_space<vmem>>, vector<512x512xbf16>
    %cst_9 = arith.constant dense<0.000000e+00> : vector<16x512xf32>
    %15 = tpu.matmul %13, %14, %cst_9 {dimension_numbers = #tpu.dot_dimension_numbers<[1], [0], [0], [1], [0, 0, 1, 1], [], []>} : vector<16x512xbf16>, vector<512x512xbf16>, vector<16x512xf32> -> vector<16x512xf32>
    %16 = tpu.iota {dimensions = array<i32: 0>} : vector<16x1xi32>
    %c16_i32 = arith.constant 16 : i32
    %17 = arith.muli %arg1, %c16_i32 : i32
    %18 = vector.broadcast %17 : i32 to vector<16x1xi32>
    %19 = arith.addi %16, %18 : vector<16x1xi32>
    %c8_i32 = arith.constant 8 : i32
    %20 = vector.broadcast %c8_i32 : i32 to vector<16x1xi32>
    %21 = arith.cmpi slt, %19, %20 : vector<16x1xi32>
    %cst_10 = arith.constant 0.000000e+00 : f32
    %22 = vector.shape_cast %21 : vector<16x1xi1> to vector<16x1xi1>
    %23 = vector.broadcast %22 : vector<16x1xi1> to vector<16x512xi1>
    %24 = vector.broadcast %cst_10 : f32 to vector<16x512xf32>
    %25 = arith.select %23, %15, %24 : vector<16x512xi1>, vector<16x512xf32>
    %c0_i32 = arith.constant 0 : i32
    %26 = arith.cmpi eq, %arg0, %c0_i32 : i32
    %27 = arith.extui %26 : i1 to i32
    %c0_i32_11 = arith.constant 0 : i32
    %28 = arith.cmpi ne, %27, %c0_i32_11 : i32
    scf.if %28 {
      %c0_i32_13 = arith.constant 0 : i32
      %32 = arith.cmpi eq, %arg1, %c0_i32_13 : i32
      %33 = arith.extui %32 : i1 to i32
      %c0_i32_14 = arith.constant 0 : i32
      %34 = arith.cmpi ne, %33, %c0_i32_14 : i32
      scf.if %34 {
        %cst_25 = arith.constant 0.000000e+00 : f32
        %46 = vector.broadcast %cst_25 : f32 to vector<1x512xf32>
        %c0_26 = arith.constant 0 : index
        %c0_27 = arith.constant 0 : index
        %47 = vector.load %arg10[%c0_26, %c0_27] : memref<1x512xf32, #tpu.memory_space<vmem>>, vector<1x512xf32>
        tpu.vector_store %arg10[%c0_26, %c0_27], %46 {strides = array<i32>} : memref<1x512xf32, #tpu.memory_space<vmem>>, vector<1x512xf32>,
        %cst_28 = arith.constant 0.000000e+00 : f32
        %48 = vector.broadcast %cst_28 : f32 to vector<1x512xf32>
        %c0_29 = arith.constant 0 : index
        %c0_30 = arith.constant 0 : index
        %49 = vector.load %arg11[%c0_29, %c0_30] : memref<1x512xf32, #tpu.memory_space<vmem>>, vector<1x512xf32>
        tpu.vector_store %arg11[%c0_29, %c0_30], %48 {strides = array<i32>} : memref<1x512xf32, #tpu.memory_space<vmem>>, vector<1x512xf32>,
      } else {
      }
      %c0_15 = arith.constant 0 : index
      %c0_16 = arith.constant 0 : index
      %35 = vector.load %arg10[%c0_15, %c0_16] : memref<1x512xf32, #tpu.memory_space<vmem>>, vector<1x512xf32>
      %cst_17 = arith.constant dense<0.000000e+00> : vector<512xf32>
      %36 = vector.multi_reduction <add>, %25, %cst_17 [0] : vector<16x512xf32> to vector<512xf32>
      %37 = vector.shape_cast %36 : vector<512xf32> to vector<1x512xf32>
      %38 = arith.addf %35, %37 : vector<1x512xf32>
      %c0_18 = arith.constant 0 : index
      %c0_19 = arith.constant 0 : index
      %39 = vector.load %arg10[%c0_18, %c0_19] : memref<1x512xf32, #tpu.memory_space<vmem>>, vector<1x512xf32>
      tpu.vector_store %arg10[%c0_18, %c0_19], %38 {strides = array<i32>} : memref<1x512xf32, #tpu.memory_space<vmem>>, vector<1x512xf32>,
      %c0_20 = arith.constant 0 : index
      %c0_21 = arith.constant 0 : index
      %40 = vector.load %arg11[%c0_20, %c0_21] : memref<1x512xf32, #tpu.memory_space<vmem>>, vector<1x512xf32>
      %41 = arith.mulf %25, %25 : vector<16x512xf32>
      %cst_22 = arith.constant dense<0.000000e+00> : vector<512xf32>
      %42 = vector.multi_reduction <add>, %41, %cst_22 [0] : vector<16x512xf32> to vector<512xf32>
      %43 = vector.shape_cast %42 : vector<512xf32> to vector<1x512xf32>
      %44 = arith.addf %40, %43 : vector<1x512xf32>
      %c0_23 = arith.constant 0 : index
      %c0_24 = arith.constant 0 : index
      %45 = vector.load %arg11[%c0_23, %c0_24] : memref<1x512xf32, #tpu.memory_space<vmem>>, vector<1x512xf32>
      tpu.vector_store %arg11[%c0_23, %c0_24], %44 {strides = array<i32>} : memref<1x512xf32, #tpu.memory_space<vmem>>, vector<1x512xf32>,
    } else {
    }
    %c1_i32 = arith.constant 1 : i32
    %29 = arith.cmpi eq, %arg0, %c1_i32 : i32
    %30 = arith.extui %29 : i1 to i32
    %c0_i32_12 = arith.constant 0 : i32
    %31 = arith.cmpi ne, %30, %c0_i32_12 : i32
    scf.if %31 {
      %c0_i32_13 = arith.constant 0 : i32
      %32 = arith.cmpi eq, %arg1, %c0_i32_13 : i32
      %33 = arith.extui %32 : i1 to i32
      %c0_i32_14 = arith.constant 0 : i32
      %34 = arith.cmpi ne, %33, %c0_i32_14 : i32
      scf.if %34 {
        %c0_31 = arith.constant 0 : index
        %c0_32 = arith.constant 0 : index
        %61 = vector.load %arg10[%c0_31, %c0_32] : memref<1x512xf32, #tpu.memory_space<vmem>>, vector<1x512xf32>
        %cst_33 = arith.constant 1.250000e-01 : f32
        %62 = vector.broadcast %cst_33 : f32 to vector<1x512xf32>
        %63 = arith.mulf %61, %62 : vector<1x512xf32>
        %c0_34 = arith.constant 0 : index
        %c0_35 = arith.constant 0 : index
        %64 = vector.load %arg11[%c0_34, %c0_35] : memref<1x512xf32, #tpu.memory_space<vmem>>, vector<1x512xf32>
        %cst_36 = arith.constant 1.250000e-01 : f32
        %65 = vector.broadcast %cst_36 : f32 to vector<1x512xf32>
        %66 = arith.mulf %64, %65 : vector<1x512xf32>
        %67 = arith.mulf %63, %63 : vector<1x512xf32>
        %68 = arith.subf %66, %67 : vector<1x512xf32>
        %69 = vector.extract_strided_slice %0 {offsets = [1, 0], sizes = [1, 512], strides = [1, 1]} : vector<3x512xf32> to vector<1x512xf32>
        %70 = vector.extract_strided_slice %0 {offsets = [2, 0], sizes = [1, 512], strides = [1, 1]} : vector<3x512xf32> to vector<1x512xf32>
        %cst_37 = arith.constant 9.99999974E-6 : f32
        %71 = vector.broadcast %cst_37 : f32 to vector<1x512xf32>
        %72 = arith.addf %68, %71 : vector<1x512xf32>
        %73 = math.rsqrt %72 : vector<1x512xf32>
        %74 = arith.mulf %69, %73 : vector<1x512xf32>
        %c0_38 = arith.constant 0 : index
        %c0_39 = arith.constant 0 : index
        %75 = vector.load %arg12[%c0_38, %c0_39] : memref<1x512xf32, #tpu.memory_space<vmem>>, vector<1x512xf32>
        tpu.vector_store %arg12[%c0_38, %c0_39], %74 {strides = array<i32>} : memref<1x512xf32, #tpu.memory_space<vmem>>, vector<1x512xf32>,
        %76 = arith.mulf %63, %74 : vector<1x512xf32>
        %77 = arith.subf %70, %76 : vector<1x512xf32>
        %c0_40 = arith.constant 0 : index
        %c0_41 = arith.constant 0 : index
        %78 = vector.load %arg13[%c0_40, %c0_41] : memref<1x512xf32, #tpu.memory_space<vmem>>, vector<1x512xf32>
        tpu.vector_store %arg13[%c0_40, %c0_41], %77 {strides = array<i32>} : memref<1x512xf32, #tpu.memory_space<vmem>>, vector<1x512xf32>,
      } else {
      }
      %c0_15 = arith.constant 0 : index
      %c0_16 = arith.constant 0 : index
      %35 = vector.load %arg12[%c0_15, %c0_16] : memref<1x512xf32, #tpu.memory_space<vmem>>, vector<1x512xf32>
      %36 = vector.broadcast %35 : vector<1x512xf32> to vector<16x512xf32>
      %37 = arith.mulf %15, %36 : vector<16x512xf32>
      %c0_17 = arith.constant 0 : index
      %c0_18 = arith.constant 0 : index
      %38 = vector.load %arg13[%c0_17, %c0_18] : memref<1x512xf32, #tpu.memory_space<vmem>>, vector<1x512xf32>
      %39 = vector.broadcast %38 : vector<1x512xf32> to vector<16x512xf32>
      %40 = arith.addf %37, %39 : vector<16x512xf32>
      %cst_19 = arith.constant 0.000000e+00 : f32
      %41 = vector.broadcast %cst_19 : f32 to vector<16x512xf32>
      %42 = arith.cmpf ogt, %40, %41 : vector<16x512xf32>
      %cst_20 = arith.constant 2.000000e-01 : f32
      %43 = vector.broadcast %cst_20 : f32 to vector<16x512xf32>
      %44 = arith.mulf %43, %40 : vector<16x512xf32>
      %45 = arith.select %42, %40, %44 : vector<16x512xi1>, vector<16x512xf32>
      %46 = arith.truncf %45 : vector<16x512xf32> to vector<16x512xbf16>
      %c0_21 = arith.constant 0 : index
      %c0_22 = arith.constant 0 : index
      %47 = vector.load %arg6[%c0_21, %c0_22] : memref<512x64xbf16, #tpu.memory_space<vmem>>, vector<512x64xbf16>
      %cst_23 = arith.constant dense<0.000000e+00> : vector<16x64xf32>
      %48 = tpu.matmul %46, %47, %cst_23 {dimension_numbers = #tpu.dot_dimension_numbers<[1], [0], [0], [1], [0, 0, 1, 1], [], []>} : vector<16x512xbf16>, vector<512x64xbf16>, vector<16x64xf32> -> vector<16x64xf32>
      %c0_24 = arith.constant 0 : index
      %c0_25 = arith.constant 0 : index
      %49 = vector.load %arg8[%c0_24, %c0_25] : memref<1x64xf32, #tpu.memory_space<vmem>>, vector<1x64xf32>
      %50 = vector.broadcast %49 : vector<1x64xf32> to vector<16x64xf32>
      %51 = arith.addf %48, %50 : vector<16x64xf32>
      %52 = vector.extract_strided_slice %51 {offsets = [0, 0], sizes = [16, 32], strides = [1, 1]} : vector<16x64xf32> to vector<16x32xf32>
      %53 = vector.extract_strided_slice %51 {offsets = [0, 32], sizes = [16, 32], strides = [1, 1]} : vector<16x64xf32> to vector<16x32xf32>
      %cst_26 = arith.constant 5.000000e-01 : f32
      %54 = vector.broadcast %cst_26 : f32 to vector<16x32xf32>
      %55 = arith.mulf %54, %53 : vector<16x32xf32>
      %56 = math.exp %55 : vector<16x32xf32>
      %c0_27 = arith.constant 0 : index
      %c0_28 = arith.constant 0 : index
      %57 = vector.load %arg3[%c0_27, %c0_28] : memref<16x32xf32, #tpu.memory_space<vmem>>, vector<16x32xf32>
      %58 = arith.mulf %57, %56 : vector<16x32xf32>
      %59 = arith.addf %58, %52 : vector<16x32xf32>
      %c0_29 = arith.constant 0 : index
      %c0_30 = arith.constant 0 : index
      %60 = vector.load %arg9[%c0_29, %c0_30] : memref<16x32xf32, #tpu.memory_space<vmem>>, vector<16x32xf32>
      tpu.vector_store %arg9[%c0_29, %c0_30], %59 {strides = array<i32>} : memref<16x32xf32, #tpu.memory_space<vmem>>, vector<16x32xf32>,
    } else {
    }
    return
  }
  func.func @transform_0(%arg0: i32, %arg1: i32) -> (i32, i32) {
    %c0_i32 = arith.constant 0 : i32
    %c0_i32_0 = arith.constant 0 : i32
    return %arg1, %c0_i32 : i32, i32
  }
  func.func @transform_1(%arg0: i32, %arg1: i32) -> (i32, i32) {
    %0 = arith.muli %arg0, %arg1 : i32
    %c0_i32 = arith.constant 0 : i32
    %c0_i32_0 = arith.constant 0 : i32
    return %0, %c0_i32 : i32, i32
  }
  func.func @transform_2(%arg0: i32, %arg1: i32) -> (i32, i32) {
    %c0_i32 = arith.constant 0 : i32
    %c0_i32_0 = arith.constant 0 : i32
    %c0_i32_1 = arith.constant 0 : i32
    return %c0_i32, %c0_i32_0 : i32, i32
  }
  func.func @transform_3(%arg0: i32, %arg1: i32) -> (i32, i32) {
    %c0_i32 = arith.constant 0 : i32
    %c0_i32_0 = arith.constant 0 : i32
    %c0_i32_1 = arith.constant 0 : i32
    return %c0_i32, %c0_i32_0 : i32, i32
  }
  func.func @transform_4(%arg0: i32, %arg1: i32) -> (i32, i32) {
    %c0_i32 = arith.constant 0 : i32
    %c0_i32_0 = arith.constant 0 : i32
    %c0_i32_1 = arith.constant 0 : i32
    return %c0_i32, %c0_i32_0 : i32, i32
  }
  func.func @transform_5(%arg0: i32, %arg1: i32) -> (i32, i32) {
    %c0_i32 = arith.constant 0 : i32
    %c0_i32_0 = arith.constant 0 : i32
    %c0_i32_1 = arith.constant 0 : i32
    return %c0_i32, %c0_i32_0 : i32, i32
  }
  func.func @transform_6(%arg0: i32, %arg1: i32) -> (i32, i32) {
    %c0_i32 = arith.constant 0 : i32
    %c0_i32_0 = arith.constant 0 : i32
    %c0_i32_1 = arith.constant 0 : i32
    return %c0_i32, %c0_i32_0 : i32, i32
  }
  func.func @transform_7(%arg0: i32, %arg1: i32) -> (i32, i32) {
    %0 = arith.muli %arg0, %arg1 : i32
    %c0_i32 = arith.constant 0 : i32
    %c0_i32_0 = arith.constant 0 : i32
    return %0, %c0_i32 : i32, i32
  }
}

</mosaic_0001>

<llo_original>
// kernel: tpu_custom_call.1
$region0: #{tpu_custom_call.1}
  #allocation0 [shape = 'u32[]', space=smem, size = 0x4, offset = 0x4, fixed_abs, tag = 'smem constant byte address 0x4 - core index']
  #allocation1 [shape = 'u32[144,128]{1,0:T(1,128)}', space=vmem, size = 0x12000, scoped, tag = 'internal scratch']
  #allocation2 [shape = 'f32[1,512]{1,0:T(1,128)}', space=vmem, size = 0x800, scoped, tag = 'scratch operand']
  #allocation3 [shape = 'f32[1,512]{1,0:T(1,128)}', space=vmem, size = 0x800, scoped, tag = 'scratch operand']
  #allocation4 [shape = 'f32[1,512]{1,0:T(1,128)}', space=vmem, size = 0x800, scoped, tag = 'scratch operand']
  #allocation5 [shape = 'f32[1,512]{1,0:T(1,128)}', space=vmem, size = 0x800, scoped, tag = 'scratch operand']
  %s0 = inlined_call_operand.vmem [shape: f32[16,256], index: 0, kind: input, shape index: {}]
  %s1 = inlined_call_operand.vmem [shape: f32[16,32], index: 1, kind: input, shape index: {}]
  %s2 = inlined_call_operand.hbm [shape: bf16[256,512], index: 2, kind: input, shape index: {}]
  %s3 = inlined_call_operand.hbm [shape: bf16[512,512], index: 3, kind: input, shape index: {}]
  %s4 = inlined_call_operand.vmem [shape: bf16[512,64], index: 4, kind: input, shape index: {}]
  %s5 = inlined_call_operand.vmem [shape: f32[3,512], index: 5, kind: input, shape index: {}]
  %s6 = inlined_call_operand.vmem [shape: f32[1,64], index: 6, kind: input, shape index: {}]
  %s7 = inlined_call_operand.hbm [shape: f32[16,32], index: 7, kind: output, shape index: {}]
  %s8 = sld [smem:[#allocation0]]
  $region85: #{tpu_custom_call.1} parent=0
    _
  %s10 = ssub.s32 1, %s8
  %s11 = scalar_select 0, %s10, %s8
  $region1: #{tpu_custom_call.1} parent=0
    #allocation6 [shape = 'u8[262144]{0}', space=vmem, size = 0x40000, scoped, tag = 'input window, operand 2, single buffered']
    #allocation7 [shape = 's32[2]{0}', space=sflag, size = 0x8, scoped, tag = 'scoped memory for tpu_custom_call.1']
    #allocation8 [shape = 's32[2]{0}', space=sflag, size = 0x8, scoped, tag = 'scoped memory for tpu_custom_call.1']
    #allocation9 [shape = 'u8[524288]{0}', space=vmem, size = 0x80000, scoped, tag = 'input window, operand 3, single buffered']
    #allocation10 [shape = 's32[1]{0}', space=sflag, size = 0x4, scoped, tag = 'scoped memory for tpu_custom_call.1']
    #allocation11 [shape = 'u8[16384]{0}', space=vmem, size = 0x4000, scoped, tag = 'output window, operand 0']
    %12 = vsyncpa [#allocation7], 0
    %13 = vsyncpa [#allocation10], 0
    %14 = vsyncpa [#allocation8], 0
    %s15 = scalar_lea.sflag [#allocation8], 1
    %16 = vsyncpa %s15, 0
    loop: start=0, step=1, limit=4
    $region2: #{tpu_custom_call.1} parent=1 // loop_pre_header
      _
    $region3: #{tpu_custom_call.1} parent=1 // loop_header
      %s18 = sphi 0, %s22
      %p19 = scmp.ge.s32.totalorder %s18, 4
      %s25 = sphi 0, %s37
      %s26 = sphi 0, %s33
      %s27 = sphi 0, %s25
      %s28 = sphi 0, %s26
      %s29 = sphi 0, %s27
      %s30 = sphi 0, %s28
      %s40 = sphi 0, %s42
      %s43 = sphi 0, %s40
      %s44 = sphi 0, %s43
      %s60 = sphi 0, %s44
      %s68 = sphi 0, %s70
      %s71 = sphi 0, %s68
      %s72 = sphi 0, %s71
      %s88 = sphi 0, %s72
      %s92 = sphi 0, %s92
      %s94 = sphi 0, %s92
      %s95 = sphi 0, %s94
      %s109 = sphi 0, %s95
      %s113 = sphi 0, %s113
      %s115 = sphi 0, %s113
      %s116 = sphi 0, %s115
      %s130 = sphi 0, %s116
      %s134 = sphi 0, %s134
      %s136 = sphi 0, %s134
      %s137 = sphi 0, %s136
      %s151 = sphi 0, %s137
      %s155 = sphi 0, %s155
      %s157 = sphi 0, %s155
      %s158 = sphi 0, %s157
      %s172 = sphi 0, %s158
      %s176 = sphi 0, %s176
      %s178 = sphi 0, %s176
      %s179 = sphi 0, %s178
      %s193 = sphi 0, %s179
      %s201 = sphi 0, %s203
      %s204 = sphi 0, %s201
      %s205 = sphi 0, %s204
      %s221 = sphi 0, %s205
    $region4: #{tpu_custom_call.1} parent=1 // loop_header_branch
      %21 = sbr.rel (%p19) target = $region8
    $region5: #{tpu_custom_call.1} parent=1 // loop_body
      %s23 = ssub.s32 %s18, 1
      %s24 = ssub.s32 %s18, 2
      %s31 = sadd.s32 1, %s26
      %p32 = scmp.ge.s32.totalorder %s31, 1
      %s33 = scalar_select %p32, 0, %s31
      %s34 = sadd.s32 1, %s25
      %s35 = scalar_select %p32, %s34, %s25
      %p36 = scmp.ge.s32.totalorder %s35, 2
      %s37 = scalar_select %p36, 0, %s35
      %s38 = ssub.s32 %s26, %s33
      %p39 = scmp.eq.s32.totalorder %s38, 0
      %s41 = sadd.s32 %s40, 1
      %s42 = scalar_select %p39, %s40, %s41
      %p45 = pneg %p39
      %p46 = scmp.eq.s32.totalorder %s18, 1
      %p47 = por %p45, %p46
      %p48 = scmp.ne.s32.totalorder %s40, %s43
      %p49 = scmp.eq.s32.totalorder %s18, 0
      %p50 = por %p48, %p49
      %p51 = scmp.ne.s32.totalorder %s40, %s43
      %p52 = scmp.eq.s32.totalorder %s23, 1
      %p53 = por %p51, %p52
      %p54 = scmp.ne.s32.totalorder %s43, %s44
      %p55 = scmp.eq.s32.totalorder %s23, 0
      %p56 = por %p54, %p55
      %p57 = scmp.ne.s32.totalorder %s43, %s44
      %p58 = scmp.eq.s32.totalorder %s24, 1
      %p59 = por %p57, %p58
      %p61 = scmp.ne.s32.totalorder %s44, %s60
      %p62 = scmp.eq.s32.totalorder %s24, 0
      %p63 = por %p61, %p62
      %s64 = smul.u32 %s25, %s26
      %s65 = smul.u32 %s37, %s33
      %s66 = ssub.s32 %s64, %s65
      %p67 = scmp.eq.s32.totalorder %s66, 0
      %s69 = sadd.s32 %s68, 1
      %s70 = scalar_select %p67, %s68, %s69
      %p73 = pneg %p67
      %p74 = scmp.eq.s32.totalorder %s18, 1
      %p75 = por %p73, %p74
      %p76 = scmp.ne.s32.totalorder %s68, %s71
      %p77 = scmp.eq.s32.totalorder %s18, 0
      %p78 = por %p76, %p77
      %p79 = scmp.ne.s32.totalorder %s68, %s71
      %p80 = scmp.eq.s32.totalorder %s23, 1
      %p81 = por %p79, %p80
      %p82 = scmp.ne.s32.totalorder %s71, %s72
      %p83 = scmp.eq.s32.totalorder %s23, 0
      %p84 = por %p82, %p83
      %p85 = scmp.ne.s32.totalorder %s71, %s72
      %p86 = scmp.eq.s32.totalorder %s24, 1
      %p87 = por %p85, %p86
      %p89 = scmp.ne.s32.totalorder %s72, %s88
      %p90 = scmp.eq.s32.totalorder %s24, 0
      %p91 = por %p89, %p90
      %s93 = sadd.s32 %s92, 1
      %p96 = scmp.eq.s32.totalorder %s18, 1
      %p97 = scmp.ne.s32.totalorder %s92, %s94
      %p98 = scmp.eq.s32.totalorder %s18, 0
      %p99 = por %p97, %p98
      %p100 = scmp.ne.s32.totalorder %s92, %s94
      %p101 = scmp.eq.s32.totalorder %s23, 1
      %p102 = por %p100, %p101
      %p103 = scmp.ne.s32.totalorder %s94, %s95
      %p104 = scmp.eq.s32.totalorder %s23, 0
      %p105 = por %p103, %p104
      %p106 = scmp.ne.s32.totalorder %s94, %s95
      %p107 = scmp.eq.s32.totalorder %s24, 1
      %p108 = por %p106, %p107
      %p110 = scmp.ne.s32.totalorder %s95, %s109
      %p111 = scmp.eq.s32.totalorder %s24, 0
      %p112 = por %p110, %p111
      %s114 = sadd.s32 %s113, 1
      %p117 = scmp.eq.s32.totalorder %s18, 1
      %p118 = scmp.ne.s32.totalorder %s113, %s115
      %p119 = scmp.eq.s32.totalorder %s18, 0
      %p120 = por %p118, %p119
      %p121 = scmp.ne.s32.totalorder %s113, %s115
      %p122 = scmp.eq.s32.totalorder %s23, 1
      %p123 = por %p121, %p122
      %p124 = scmp.ne.s32.totalorder %s115, %s116
      %p125 = scmp.eq.s32.totalorder %s23, 0
      %p126 = por %p124, %p125
      %p127 = scmp.ne.s32.totalorder %s115, %s116
      %p128 = scmp.eq.s32.totalorder %s24, 1
      %p129 = por %p127, %p128
      %p131 = scmp.ne.s32.totalorder %s116, %s130
      %p132 = scmp.eq.s32.totalorder %s24, 0
      %p133 = por %p131, %p132
      %s135 = sadd.s32 %s134, 1
      %p138 = scmp.eq.s32.totalorder %s18, 1
      %p139 = scmp.ne.s32.totalorder %s134, %s136
      %p140 = scmp.eq.s32.totalorder %s18, 0
      %p141 = por %p139, %p140
      %p142 = scmp.ne.s32.totalorder %s134, %s136
      %p143 = scmp.eq.s32.totalorder %s23, 1
      %p144 = por %p142, %p143
      %p145 = scmp.ne.s32.totalorder %s136, %s137
      %p146 = scmp.eq.s32.totalorder %s23, 0
      %p147 = por %p145, %p146
      %p148 = scmp.ne.s32.totalorder %s136, %s137
      %p149 = scmp.eq.s32.totalorder %s24, 1
      %p150 = por %p148, %p149
      %p152 = scmp.ne.s32.totalorder %s137, %s151
      %p153 = scmp.eq.s32.totalorder %s24, 0
      %p154 = por %p152, %p153
      %s156 = sadd.s32 %s155, 1
      %p159 = scmp.eq.s32.totalorder %s18, 1
      %p160 = scmp.ne.s32.totalorder %s155, %s157
      %p161 = scmp.eq.s32.totalorder %s18, 0
      %p162 = por %p160, %p161
      %p163 = scmp.ne.s32.totalorder %s155, %s157
      %p164 = scmp.eq.s32.totalorder %s23, 1
      %p165 = por %p163, %p164
      %p166 = scmp.ne.s32.totalorder %s157, %s158
      %p167 = scmp.eq.s32.totalorder %s23, 0
      %p168 = por %p166, %p167
      %p169 = scmp.ne.s32.totalorder %s157, %s158
      %p170 = scmp.eq.s32.totalorder %s24, 1
      %p171 = por %p169, %p170
      %p173 = scmp.ne.s32.totalorder %s158, %s172
      %p174 = scmp.eq.s32.totalorder %s24, 0
      %p175 = por %p173, %p174
      %s177 = sadd.s32 %s176, 1
      %p180 = scmp.eq.s32.totalorder %s18, 1
      %p181 = scmp.ne.s32.totalorder %s176, %s178
      %p182 = scmp.eq.s32.totalorder %s18, 0
      %p183 = por %p181, %p182
      %p184 = scmp.ne.s32.totalorder %s176, %s178
      %p185 = scmp.eq.s32.totalorder %s23, 1
      %p186 = por %p184, %p185
      %p187 = scmp.ne.s32.totalorder %s178, %s179
      %p188 = scmp.eq.s32.totalorder %s23, 0
      %p189 = por %p187, %p188
      %p190 = scmp.ne.s32.totalorder %s178, %s179
      %p191 = scmp.eq.s32.totalorder %s24, 1
      %p192 = por %p190, %p191
      %p194 = scmp.ne.s32.totalorder %s179, %s193
      %p195 = scmp.eq.s32.totalorder %s24, 0
      %p196 = por %p194, %p195
      %s197 = smul.u32 %s25, %s26
      %s198 = smul.u32 %s37, %s33
      %s199 = ssub.s32 %s197, %s198
      %p200 = scmp.eq.s32.totalorder %s199, 0
      %s202 = sadd.s32 %s201, 1
      %s203 = scalar_select %p200, %s201, %s202
      %p206 = pneg %p200
      %p207 = scmp.eq.s32.totalorder %s18, 1
      %p208 = por %p206, %p207
      %p209 = scmp.ne.s32.totalorder %s201, %s204
      %p210 = scmp.eq.s32.totalorder %s18, 0
      %p211 = por %p209, %p210
      %p212 = scmp.ne.s32.totalorder %s201, %s204
      %p213 = scmp.eq.s32.totalorder %s23, 1
      %p214 = por %p212, %p213
      %p215 = scmp.ne.s32.totalorder %s204, %s205
      %p216 = scmp.eq.s32.totalorder %s23, 0
      %p217 = por %p215, %p216
      %p218 = scmp.ne.s32.totalorder %s204, %s205
      %p219 = scmp.eq.s32.totalorder %s24, 1
      %p220 = por %p218, %p219
      %p222 = scmp.ne.s32.totalorder %s205, %s221
      %p223 = scmp.eq.s32.totalorder %s24, 0
      %p224 = por %p222, %p223
      %p225 = scmp.le.s32.totalorder 1, %s18
      %p226 = scmp.lt.s32.totalorder %s18, 3
      %p227 = pnand %p225, %p226
      %p228 = pneg %p227
      // Predicated region
      $region9: #{tpu_custom_call.1} parent=5 // pred_check
        _
      $region10: #{tpu_custom_call.1} parent=5 // pred_check_branch
        %230 = sbr.rel (%p227) target = $region12
      $region11: #{tpu_custom_call.1} parent=5 // pred_region
        %s231 = ssub.s32 %s18, 1
        // Predicated region
        $region13: #{tpu_custom_call.1} parent=11 // pred_check
          %p232 = pneg %p56
        $region14: #{tpu_custom_call.1} parent=11 // pred_check_branch
          %234 = sbr.rel (%p232) target = $region16
        $region15: #{tpu_custom_call.1} parent=11 // pred_region
          %s235 = smul.u32 2, %s28
          %p236 = scmp.lt.s32.totalorder %s235, 1
          %s237 = scalar_select %p236, %s235, 1
          %s238 = smul.addr %s237, 2
          %s239 = smul.addr %s238, 8
          %s240 = scalar_lea.vmem %s0, %s239
          %s241 = smul.u32 2, %s28
        $region16: #{tpu_custom_call.1} parent=11 // pred_fallthru
          _
        // Predicated region
        $region17: #{tpu_custom_call.1} parent=11 // pred_check
          %p242 = pneg %p105
        $region18: #{tpu_custom_call.1} parent=11 // pred_check_branch
          %244 = sbr.rel (%p242) target = $region20
        $region19: #{tpu_custom_call.1} parent=11 // pred_region
          %s246 = ssub.s32 8192, 8192
          %247 = vsyncadd [#allocation7], %s246
          %s248 = sshll.u32 [#allocation6], 4
          %s249 = int_to_ptr.vmem [resolvable:$true] %s248
          %254 = dma.hbm_to_vmem [thread:$0]  %s2, 8192, %s249, [#allocation7], 256, 256, 16
        $region20: #{tpu_custom_call.1} parent=11 // pred_fallthru
          _
        // Predicated region
        $region21: #{tpu_custom_call.1} parent=11 // pred_check
          %p255 = pneg %p126
        $region22: #{tpu_custom_call.1} parent=11 // pred_check_branch
          %257 = sbr.rel (%p255) target = $region24
        $region23: #{tpu_custom_call.1} parent=11 // pred_region
          %s259 = ssub.s32 16384, 16384
          %260 = vsyncadd [#allocation10], %s259
          %s261 = sshll.u32 [#allocation9], 4
          %s262 = int_to_ptr.vmem [resolvable:$true] %s261
          %267 = dma.hbm_to_vmem [thread:$0]  %s3, 16384, %s262, [#allocation10], 256, 256, 16
        $region24: #{tpu_custom_call.1} parent=11 // pred_fallthru
          _
        // Predicated region
        $region25: #{tpu_custom_call.1} parent=11 // pred_check
          %p268 = pneg %p147
        $region26: #{tpu_custom_call.1} parent=11 // pred_check_branch
          %270 = sbr.rel (%p268) target = $region28
        $region27: #{tpu_custom_call.1} parent=11 // pred_region
          _
        $region28: #{tpu_custom_call.1} parent=11 // pred_fallthru
          _
        // Predicated region
        $region29: #{tpu_custom_call.1} parent=11 // pred_check
          %p271 = pneg %p168
        $region30: #{tpu_custom_call.1} parent=11 // pred_check_branch
          %273 = sbr.rel (%p271) target = $region32
        $region31: #{tpu_custom_call.1} parent=11 // pred_region
          _
        $region32: #{tpu_custom_call.1} parent=11 // pred_fallthru
          _
        // Predicated region
        $region33: #{tpu_custom_call.1} parent=11 // pred_check
          %p274 = pneg %p189
        $region34: #{tpu_custom_call.1} parent=11 // pred_check_branch
          %276 = sbr.rel (%p274) target = $region36
        $region35: #{tpu_custom_call.1} parent=11 // pred_region
          _
        $region36: #{tpu_custom_call.1} parent=11 // pred_fallthru
          _
      $region12: #{tpu_custom_call.1} parent=5 // pred_fallthru
        _
      %p277 = scmp.lt.s32.totalorder %s18, 2
      // Predicated region
      $region37: #{tpu_custom_call.1} parent=5 // pred_check
        %p278 = pneg %p277
      $region38: #{tpu_custom_call.1} parent=5 // pred_check_branch
        %280 = sbr.rel (%p278) target = $region40
      $region39: #{tpu_custom_call.1} parent=5 // pred_region
        // Predicated region
        $region41: #{tpu_custom_call.1} parent=39 // pred_check
          %p281 = pneg %p78
        $region42: #{tpu_custom_call.1} parent=39 // pred_check_branch
          %283 = sbr.rel (%p281) target = $region44
        $region43: #{tpu_custom_call.1} parent=39 // pred_region
          %s284 = smul.u32 %s25, %s26
          %s285 = smul.u32 2, %s284
          %p286 = scmp.lt.s32.totalorder %s285, 1
          %s287 = scalar_select %p286, %s285, 1
          %s288 = smul.addr %s287, 8
          %s289 = scalar_lea.vmem %s1, %s288
          %s290 = smul.u32 %s25, %s26
          %s291 = smul.u32 2, %s290
        $region44: #{tpu_custom_call.1} parent=39 // pred_fallthru
          _
      $region40: #{tpu_custom_call.1} parent=5 // pred_fallthru
        _
      %p292 = scmp.le.s32.totalorder 1, %s18
      %p293 = scmp.lt.s32.totalorder %s18, 3
      %p294 = pnand %p292, %p293
      %p295 = pneg %p294
      // Predicated region
      $region45: #{tpu_custom_call.1} parent=5 // pred_check
        _
      $region46: #{tpu_custom_call.1} parent=5 // pred_check_branch
        %297 = sbr.rel (%p294) target = $region48
      $region47: #{tpu_custom_call.1} parent=5 // pred_region
        %s298 = ssub.s32 %s18, 1
        // Predicated region
        $region49: #{tpu_custom_call.1} parent=47 // pred_check
          %p299 = pneg %p105
        $region50: #{tpu_custom_call.1} parent=47 // pred_check_branch
          %301 = sbr.rel (%p299) target = $region52
        $region51: #{tpu_custom_call.1} parent=47 // pred_region
          %302 = dma.done [#allocation7], 8192
        $region52: #{tpu_custom_call.1} parent=47 // pred_fallthru
          _
        // Predicated region
        $region53: #{tpu_custom_call.1} parent=47 // pred_check
          %p303 = pneg %p126
        $region54: #{tpu_custom_call.1} parent=47 // pred_check_branch
          %305 = sbr.rel (%p303) target = $region56
        $region55: #{tpu_custom_call.1} parent=47 // pred_region
          %306 = dma.done [#allocation10], 16384
        $region56: #{tpu_custom_call.1} parent=47 // pred_fallthru
          _
        %s307 = smul.u32 2, %s28
        %p308 = scmp.lt.s32.totalorder %s307, 1
        %s309 = scalar_select %p308, %s307, 1
        %s310 = smul.addr %s309, 2
        %s311 = smul.addr %s310, 8
        %s312 = scalar_lea.vmem %s0, %s311
        %p313 = pneg %p56
        %p314 = pneg %p53
        %s315 = smul.u32 %s27, %s28
        %s316 = smul.u32 2, %s315
        %p317 = scmp.lt.s32.totalorder %s316, 1
        %s318 = scalar_select %p317, %s316, 1
        %s319 = smul.addr %s318, 8
        %s320 = scalar_lea.vmem %s1, %s319
        %p321 = pneg %p84
        %p322 = pneg %p81
        %p323 = pneg %p105
        %p324 = pneg %p102
        %p325 = pneg %p126
        %p326 = pneg %p123
        %p327 = pneg %p147
        %p328 = pneg %p144
        %p329 = pneg %p168
        %p330 = pneg %p165
        %p331 = pneg %p189
        %p332 = pneg %p186
        %p333 = pneg %p217
        %p334 = pneg %p214
        %s335 = sand.u32 %s204, 1
        %s336 = scalar_lea.sflag [#allocation8], %s335
        %s337 = sand.u32 %s204, 1
        %s338 = smul.addr %s337, 16
        %s339 = scalar_lea.vmem [#allocation11], %s338
        %s340 = smul.u32 2, %s28
        %p341 = scmp.lt.s32.totalorder %s340, 1
        %s342 = scalar_select %p341, %s340, 1
        %s343 = smul.addr %s342, 2
        %s344 = smul.addr %s343, 8
        %s345 = scalar_lea.vmem %s0, %s344
        %s346 = smul.u32 2, %s28
        %s347 = smul.u32 %s27, %s28
        %s348 = smul.u32 2, %s347
        %p349 = scmp.lt.s32.totalorder %s348, 1
        %s350 = scalar_select %p349, %s348, 1
        %s351 = smul.addr %s350, 8
        %s352 = scalar_lea.vmem %s1, %s351
        %s353 = smul.u32 %s27, %s28
        %s354 = smul.u32 2, %s353
        %s355 = smul.u32 %s27, %s28
        %s356 = smul.u32 2, %s355
        %v358 = vld [vmem:[%s5] sm:$0x77]
        %v359 = vld [vmem:[%s5 + $0x8] sm:$0x77]
        %v360 = vld [vmem:[%s345] sm:$0xff]
        %v361 = vld [vmem:[%s345 + $0x8] sm:$0xff]
        %v362 = vld [vmem:[%s345 + $0x10] sm:$0xff]
        %v363 = vld [vmem:[%s345 + $0x18] sm:$0xff]
        %v364 = vpack.c.bf16 %v362, %v360
        %v365 = vpack.c.bf16 %v363, %v361
        %v366 = vld [vmem:[#allocation6] sm:$0xff]
        %v367 = vld [vmem:[#allocation6 + $0x8] sm:$0xff]
        %v368 = vld [vmem:[#allocation6 + $0x10] sm:$0xff]
        %v369 = vld [vmem:[#allocation6 + $0x18] sm:$0xff]
        %v370 = vld [vmem:[#allocation6 + $0x20] sm:$0xff]
        %v371 = vld [vmem:[#allocation6 + $0x28] sm:$0xff]
        %v372 = vld [vmem:[#allocation6 + $0x30] sm:$0xff]
        %v373 = vld [vmem:[#allocation6 + $0x38] sm:$0xff]
        %v374 = vld [vmem:[#allocation6 + $0x40] sm:$0xff]
        %v375 = vld [vmem:[#allocation6 + $0x48] sm:$0xff]
        %v376 = vld [vmem:[#allocation6 + $0x50] sm:$0xff]
        %v377 = vld [vmem:[#allocation6 + $0x58] sm:$0xff]
        %v378 = vld [vmem:[#allocation6 + $0x60] sm:$0xff]
        %v379 = vld [vmem:[#allocation6 + $0x68] sm:$0xff]
        %v380 = vld [vmem:[#allocation6 + $0x70] sm:$0xff]
        %v381 = vld [vmem:[#allocation6 + $0x78] sm:$0xff]
        %v382 = vld [vmem:[#allocation6 + $0x80] sm:$0xff]
        %v383 = vld [vmem:[#allocation6 + $0x88] sm:$0xff]
        %v384 = vld [vmem:[#allocation6 + $0x90] sm:$0xff]
        %v385 = vld [vmem:[#allocation6 + $0x98] sm:$0xff]
        %v386 = vld [vmem:[#allocation6 + $0xa0] sm:$0xff]
        %v387 = vld [vmem:[#allocation6 + $0xa8] sm:$0xff]
        %v388 = vld [vmem:[#allocation6 + $0xb0] sm:$0xff]
        %v389 = vld [vmem:[#allocation6 + $0xb8] sm:$0xff]
        %v390 = vld [vmem:[#allocation6 + $0xc0] sm:$0xff]
        %v391 = vld [vmem:[#allocation6 + $0xc8] sm:$0xff]
        %v392 = vld [vmem:[#allocation6 + $0xd0] sm:$0xff]
        %v393 = vld [vmem:[#allocation6 + $0xd8] sm:$0xff]
        %v394 = vld [vmem:[#allocation6 + $0xe0] sm:$0xff]
        %v395 = vld [vmem:[#allocation6 + $0xe8] sm:$0xff]
        %v396 = vld [vmem:[#allocation6 + $0xf0] sm:$0xff]
        %v397 = vld [vmem:[#allocation6 + $0xf8] sm:$0xff]
        %v398 = vld [vmem:[#allocation6 + $0x100] sm:$0xff]
        %v399 = vld [vmem:[#allocation6 + $0x108] sm:$0xff]
        %v400 = vld [vmem:[#allocation6 + $0x110] sm:$0xff]
        %v401 = vld [vmem:[#allocation6 + $0x118] sm:$0xff]
        %v402 = vld [vmem:[#allocation6 + $0x120] sm:$0xff]
        %v403 = vld [vmem:[#allocation6 + $0x128] sm:$0xff]
        %v404 = vld [vmem:[#allocation6 + $0x130] sm:$0xff]
        %v405 = vld [vmem:[#allocation6 + $0x138] sm:$0xff]
        %v406 = vld [vmem:[#allocation6 + $0x140] sm:$0xff]
        %v407 = vld [vmem:[#allocation6 + $0x148] sm:$0xff]
        %v408 = vld [vmem:[#allocation6 + $0x150] sm:$0xff]
        %v409 = vld [vmem:[#allocation6 + $0x158] sm:$0xff]
        %v410 = vld [vmem:[#allocation6 + $0x160] sm:$0xff]
        %v411 = vld [vmem:[#allocation6 + $0x168] sm:$0xff]
        %v412 = vld [vmem:[#allocation6 + $0x170] sm:$0xff]
        %v413 = vld [vmem:[#allocation6 + $0x178] sm:$0xff]
        %v414 = vld [vmem:[#allocation6 + $0x180] sm:$0xff]
        %v415 = vld [vmem:[#allocation6 + $0x188] sm:$0xff]
        %v416 = vld [vmem:[#allocation6 + $0x190] sm:$0xff]
        %v417 = vld [vmem:[#allocation6 + $0x198] sm:$0xff]
        %v418 = vld [vmem:[#allocation6 + $0x1a0] sm:$0xff]
        %v419 = vld [vmem:[#allocation6 + $0x1a8] sm:$0xff]
        %v420 = vld [vmem:[#allocation6 + $0x1b0] sm:$0xff]
        %v421 = vld [vmem:[#allocation6 + $0x1b8] sm:$0xff]
        %v422 = vld [vmem:[#allocation6 + $0x1c0] sm:$0xff]
        %v423 = vld [vmem:[#allocation6 + $0x1c8] sm:$0xff]
        %v424 = vld [vmem:[#allocation6 + $0x1d0] sm:$0xff]
        %v425 = vld [vmem:[#allocation6 + $0x1d8] sm:$0xff]
        %v426 = vld [vmem:[#allocation6 + $0x1e0] sm:$0xff]
        %v427 = vld [vmem:[#allocation6 + $0x1e8] sm:$0xff]
        %v428 = vld [vmem:[#allocation6 + $0x1f0] sm:$0xff]
        %v429 = vld [vmem:[#allocation6 + $0x1f8] sm:$0xff]
        %v432 = vlaneseq
        %v433 = vshrl.u32 %v432, 7
        %v434 = vsub.s32 0, %v433
        %v435 = vrot.slane %v358, %v434
        %v436 = vlaneseq
        %v437 = vshrl.u32 %v436, 7
        %v438 = vsub.s32 4, %v437
        %v439 = vrot.slane %v358, %v438
        %v440 = vlaneseq
        %v441 = vshrl.u32 %v440, 7
        %v442 = vsub.s32 0, %v441
        %v443 = vrot.slane %v359, %v442
        %v444 = vlaneseq
        %v445 = vshrl.u32 %v444, 7
        %v446 = vsub.s32 4, %v445
        %v447 = vrot.slane %v359, %v446
        %v452 = vlaneseq
        %v453 = vshrl.u32 %v452, 7
        %v454 = vsub.s32 0, %v453
        %v455 = vrot.slane %v435, %v454
        %v456 = vlaneseq
        %v457 = vshrl.u32 %v456, 7
        %v458 = vsub.s32 0, %v457
        %v459 = vrot.slane %v439, %v458
        %v460 = vlaneseq
        %v461 = vshrl.u32 %v460, 7
        %v462 = vsub.s32 0, %v461
        %v463 = vrot.slane %v443, %v462
        %v464 = vlaneseq
        %v465 = vshrl.u32 %v464, 7
        %v466 = vsub.s32 0, %v465
        %v467 = vrot.slane %v447, %v466
        %v532 = vunpack.c.l.b16 %v366
        %v533 = vunpack.c.h.b16 %v366
        %v534 = vunpack.c.l.b16 %v367
        %v535 = vunpack.c.h.b16 %v367
        %v536 = vunpack.c.l.b16 %v368
        %v537 = vunpack.c.h.b16 %v368
        %v538 = vunpack.c.l.b16 %v369
        %v539 = vunpack.c.h.b16 %v369
        %v540 = vunpack.c.l.b16 %v370
        %v541 = vunpack.c.h.b16 %v370
        %v542 = vunpack.c.l.b16 %v371
        %v543 = vunpack.c.h.b16 %v371
        %v544 = vunpack.c.l.b16 %v372
        %v545 = vunpack.c.h.b16 %v372
        %v546 = vunpack.c.l.b16 %v373
        %v547 = vunpack.c.h.b16 %v373
        %v548 = vunpack.c.l.b16 %v374
        %v549 = vunpack.c.h.b16 %v374
        %v550 = vunpack.c.l.b16 %v375
        %v551 = vunpack.c.h.b16 %v375
        %v552 = vunpack.c.l.b16 %v376
        %v553 = vunpack.c.h.b16 %v376
        %v554 = vunpack.c.l.b16 %v377
        %v555 = vunpack.c.h.b16 %v377
        %v556 = vunpack.c.l.b16 %v378
        %v557 = vunpack.c.h.b16 %v378
        %v558 = vunpack.c.l.b16 %v379
        %v559 = vunpack.c.h.b16 %v379
        %v560 = vunpack.c.l.b16 %v380
        %v561 = vunpack.c.h.b16 %v380
        %v562 = vunpack.c.l.b16 %v381
        %v563 = vunpack.c.h.b16 %v381
        %v564 = vunpack.c.l.b16 %v382
        %v565 = vunpack.c.h.b16 %v382
        %v566 = vunpack.c.l.b16 %v383
        %v567 = vunpack.c.h.b16 %v383
        %v568 = vunpack.c.l.b16 %v384
        %v569 = vunpack.c.h.b16 %v384
        %v570 = vunpack.c.l.b16 %v385
        %v571 = vunpack.c.h.b16 %v385
        %v572 = vunpack.c.l.b16 %v386
        %v573 = vunpack.c.h.b16 %v386
        %v574 = vunpack.c.l.b16 %v387
        %v575 = vunpack.c.h.b16 %v387
        %v576 = vunpack.c.l.b16 %v388
        %v577 = vunpack.c.h.b16 %v388
        %v578 = vunpack.c.l.b16 %v389
        %v579 = vunpack.c.h.b16 %v389
        %v580 = vunpack.c.l.b16 %v390
        %v581 = vunpack.c.h.b16 %v390
        %v582 = vunpack.c.l.b16 %v391
        %v583 = vunpack.c.h.b16 %v391
        %v584 = vunpack.c.l.b16 %v392
        %v585 = vunpack.c.h.b16 %v392
        %v586 = vunpack.c.l.b16 %v393
        %v587 = vunpack.c.h.b16 %v393
        %v588 = vunpack.c.l.b16 %v394
        %v589 = vunpack.c.h.b16 %v394
        %v590 = vunpack.c.l.b16 %v395
        %v591 = vunpack.c.h.b16 %v395
        %v592 = vunpack.c.l.b16 %v396
        %v593 = vunpack.c.h.b16 %v396
        %v594 = vunpack.c.l.b16 %v397
        %v595 = vunpack.c.h.b16 %v397
        %v596 = vunpack.c.l.b16 %v398
        %v597 = vunpack.c.h.b16 %v398
        %v598 = vunpack.c.l.b16 %v399
        %v599 = vunpack.c.h.b16 %v399
        %v600 = vunpack.c.l.b16 %v400
        %v601 = vunpack.c.h.b16 %v400
        %v602 = vunpack.c.l.b16 %v401
        %v603 = vunpack.c.h.b16 %v401
        %v604 = vunpack.c.l.b16 %v402
        %v605 = vunpack.c.h.b16 %v402
        %v606 = vunpack.c.l.b16 %v403
        %v607 = vunpack.c.h.b16 %v403
        %v608 = vunpack.c.l.b16 %v404
        %v609 = vunpack.c.h.b16 %v404
        %v610 = vunpack.c.l.b16 %v405
        %v611 = vunpack.c.h.b16 %v405
        %v612 = vunpack.c.l.b16 %v406
        %v613 = vunpack.c.h.b16 %v406
        %v614 = vunpack.c.l.b16 %v407
        %v615 = vunpack.c.h.b16 %v407
        %v616 = vunpack.c.l.b16 %v408
        %v617 = vunpack.c.h.b16 %v408
        %v618 = vunpack.c.l.b16 %v409
        %v619 = vunpack.c.h.b16 %v409
        %v620 = vunpack.c.l.b16 %v410
        %v621 = vunpack.c.h.b16 %v410
        %v622 = vunpack.c.l.b16 %v411
        %v623 = vunpack.c.h.b16 %v411
        %v624 = vunpack.c.l.b16 %v412
        %v625 = vunpack.c.h.b16 %v412
        %v626 = vunpack.c.l.b16 %v413
        %v627 = vunpack.c.h.b16 %v413
        %v628 = vunpack.c.l.b16 %v414
        %v629 = vunpack.c.h.b16 %v414
        %v630 = vunpack.c.l.b16 %v415
        %v631 = vunpack.c.h.b16 %v415
        %v632 = vunpack.c.l.b16 %v416
        %v633 = vunpack.c.h.b16 %v416
        %v634 = vunpack.c.l.b16 %v417
        %v635 = vunpack.c.h.b16 %v417
        %v636 = vunpack.c.l.b16 %v418
        %v637 = vunpack.c.h.b16 %v418
        %v638 = vunpack.c.l.b16 %v419
        %v639 = vunpack.c.h.b16 %v419
        %v640 = vunpack.c.l.b16 %v420
        %v641 = vunpack.c.h.b16 %v420
        %v642 = vunpack.c.l.b16 %v421
        %v643 = vunpack.c.h.b16 %v421
        %v644 = vunpack.c.l.b16 %v422
        %v645 = vunpack.c.h.b16 %v422
        %v646 = vunpack.c.l.b16 %v423
        %v647 = vunpack.c.h.b16 %v423
        %v648 = vunpack.c.l.b16 %v424
        %v649 = vunpack.c.h.b16 %v424
        %v650 = vunpack.c.l.b16 %v425
        %v651 = vunpack.c.h.b16 %v425
        %v652 = vunpack.c.l.b16 %v426
        %v653 = vunpack.c.h.b16 %v426
        %v654 = vunpack.c.l.b16 %v427
        %v655 = vunpack.c.h.b16 %v427
        %v656 = vunpack.c.l.b16 %v428
        %v657 = vunpack.c.h.b16 %v428
        %v658 = vunpack.c.l.b16 %v429
        %v659 = vunpack.c.h.b16 %v429
        %v660 = vpack.c.b16 %v536, %v532
        %v661 = vpack.c.b16 %v537, %v533
        %v662 = vpack.c.b16 %v538, %v534
        %v663 = vpack.c.b16 %v539, %v535
        %v664 = vpack.c.b16 %v544, %v540
        %v665 = vpack.c.b16 %v545, %v541
        %v666 = vpack.c.b16 %v546, %v542
        %v667 = vpack.c.b16 %v547, %v543
        %v668 = vpack.c.b16 %v552, %v548
        %v669 = vpack.c.b16 %v553, %v549
        %v670 = vpack.c.b16 %v554, %v550
        %v671 = vpack.c.b16 %v555, %v551
        %v672 = vpack.c.b16 %v560, %v556
        %v673 = vpack.c.b16 %v561, %v557
        %v674 = vpack.c.b16 %v562, %v558
        %v675 = vpack.c.b16 %v563, %v559
        %v676 = vpack.c.b16 %v568, %v564
        %v677 = vpack.c.b16 %v569, %v565
        %v678 = vpack.c.b16 %v570, %v566
        %v679 = vpack.c.b16 %v571, %v567
        %v680 = vpack.c.b16 %v576, %v572
        %v681 = vpack.c.b16 %v577, %v573
        %v682 = vpack.c.b16 %v578, %v574
        %v683 = vpack.c.b16 %v579, %v575
        %v684 = vpack.c.b16 %v584, %v580
        %v685 = vpack.c.b16 %v585, %v581
        %v686 = vpack.c.b16 %v586, %v582
        %v687 = vpack.c.b16 %v587, %v583
        %v688 = vpack.c.b16 %v592, %v588
        %v689 = vpack.c.b16 %v593, %v589
        %v690 = vpack.c.b16 %v594, %v590
        %v691 = vpack.c.b16 %v595, %v591
        %v692 = vpack.c.b16 %v600, %v596
        %v693 = vpack.c.b16 %v601, %v597
        %v694 = vpack.c.b16 %v602, %v598
        %v695 = vpack.c.b16 %v603, %v599
        %v696 = vpack.c.b16 %v608, %v604
        %v697 = vpack.c.b16 %v609, %v605
        %v698 = vpack.c.b16 %v610, %v606
        %v699 = vpack.c.b16 %v611, %v607
        %v700 = vpack.c.b16 %v616, %v612
        %v701 = vpack.c.b16 %v617, %v613
        %v702 = vpack.c.b16 %v618, %v614
        %v703 = vpack.c.b16 %v619, %v615
        %v704 = vpack.c.b16 %v624, %v620
        %v705 = vpack.c.b16 %v625, %v621
        %v706 = vpack.c.b16 %v626, %v622
        %v707 = vpack.c.b16 %v627, %v623
        %v708 = vpack.c.b16 %v632, %v628
        %v709 = vpack.c.b16 %v633, %v629
        %v710 = vpack.c.b16 %v634, %v630
        %v711 = vpack.c.b16 %v635, %v631
        %v712 = vpack.c.b16 %v640, %v636
        %v713 = vpack.c.b16 %v641, %v637
        %v714 = vpack.c.b16 %v642, %v638
        %v715 = vpack.c.b16 %v643, %v639
        %v716 = vpack.c.b16 %v648, %v644
        %v717 = vpack.c.b16 %v649, %v645
        %v718 = vpack.c.b16 %v650, %v646
        %v719 = vpack.c.b16 %v651, %v647
        %v720 = vpack.c.b16 %v656, %v652
        %v721 = vpack.c.b16 %v657, %v653
        %v722 = vpack.c.b16 %v658, %v654
        %v723 = vpack.c.b16 %v659, %v655
        %788 = vmatprep.subr.bf16.mxu0 %v689
        %789 = vmatpush1.bf16.msra.mxu0 %v688
        %790 = vmatprep.subr.bf16.mxu0 %v685
        %791 = vmatpush1.bf16.msra.mxu0 %v684
        %792 = vmatprep.subr.bf16.mxu0 %v681
        %793 = vmatpush1.bf16.msra.mxu0 %v680
        %794 = vmatprep.subr.bf16.mxu0 %v677
        %795 = vmatpush1.bf16.msra.mxu0 %v676
        %796 = vmatprep.subr.bf16.mxu0 %v673
        %797 = vmatpush1.bf16.msra.mxu0 %v672
        %798 = vmatprep.subr.bf16.mxu0 %v669
        %799 = vmatpush1.bf16.msra.mxu0 %v668
        %800 = vmatprep.subr.bf16.mxu0 %v665
        %801 = vmatpush1.bf16.msra.mxu0 %v664
        %802 = vmatprep.subr.bf16.mxu0 %v661
        %803 = vmatpush1.bf16.msra.mxu0 %v660
        %804 = vmatprep.subr.bf16.mxu0 %v721
        %805 = vmatpush2.bf16.msra.mxu0 %v720
        %806 = vmatprep.subr.bf16.mxu0 %v717
        %807 = vmatpush2.bf16.msra.mxu0 %v716
        %808 = vmatprep.subr.bf16.mxu0 %v713
        %809 = vmatpush2.bf16.msra.mxu0 %v712
        %810 = vmatprep.subr.bf16.mxu0 %v709
        %811 = vmatpush2.bf16.msra.mxu0 %v708
        %812 = vmatprep.subr.bf16.mxu0 %v705
        %813 = vmatpush2.bf16.msra.mxu0 %v704
        %814 = vmatprep.subr.bf16.mxu0 %v701
        %815 = vmatpush2.bf16.msra.mxu0 %v700
        %816 = vmatprep.subr.bf16.mxu0 %v697
        %817 = vmatpush2.bf16.msra.mxu0 %v696
        %818 = vmatprep.subr.bf16.mxu0 %v693
        %819 = vmatpush2.bf16.msra.mxu0 %v692
        %820 = vmatprep.mubr.bf16.mxu0 %v365
        %821 = vmatmul.mubr.bf16.gmra.mxu0 %v364
        %v822 = vpop.f32.mrf.mxu0
        %v823 = vadd.f32 %v455, %v822
        %v824 = vpop.f32.mrf.mxu0
        %v825 = vadd.f32 %v459, %v824
        %v826 = vpop.f32.mrf.mxu0
        %v827 = vadd.f32 %v455, %v826
        %v828 = vpop.f32.mrf.mxu0
        %v829 = vadd.f32 %v459, %v828
        %830 = vdwg.mxu0
        %831 = vmatprep.subr.bf16.mxu0 %v691
        %832 = vmatpush1.bf16.msra.mxu0 %v690
        %833 = vmatprep.subr.bf16.mxu0 %v687
        %834 = vmatpush1.bf16.msra.mxu0 %v686
        %835 = vmatprep.subr.bf16.mxu0 %v683
        %836 = vmatpush1.bf16.msra.mxu0 %v682
        %837 = vmatprep.subr.bf16.mxu0 %v679
        %838 = vmatpush1.bf16.msra.mxu0 %v678
        %839 = vmatprep.subr.bf16.mxu0 %v675
        %840 = vmatpush1.bf16.msra.mxu0 %v674
        %841 = vmatprep.subr.bf16.mxu0 %v671
        %842 = vmatpush1.bf16.msra.mxu0 %v670
        %843 = vmatprep.subr.bf16.mxu0 %v667
        %844 = vmatpush1.bf16.msra.mxu0 %v666
        %845 = vmatprep.subr.bf16.mxu0 %v663
        %846 = vmatpush1.bf16.msra.mxu0 %v662
        %847 = vmatprep.subr.bf16.mxu0 %v723
        %848 = vmatpush2.bf16.msra.mxu0 %v722
        %849 = vmatprep.subr.bf16.mxu0 %v719
        %850 = vmatpush2.bf16.msra.mxu0 %v718
        %851 = vmatprep.subr.bf16.mxu0 %v715
        %852 = vmatpush2.bf16.msra.mxu0 %v714
        %853 = vmatprep.subr.bf16.mxu0 %v711
        %854 = vmatpush2.bf16.msra.mxu0 %v710
        %855 = vmatprep.subr.bf16.mxu0 %v707
        %856 = vmatpush2.bf16.msra.mxu0 %v706
        %857 = vmatprep.subr.bf16.mxu0 %v703
        %858 = vmatpush2.bf16.msra.mxu0 %v702
        %859 = vmatprep.subr.bf16.mxu0 %v699
        %860 = vmatpush2.bf16.msra.mxu0 %v698
        %861 = vmatprep.subr.bf16.mxu0 %v695
        %862 = vmatpush2.bf16.msra.mxu0 %v694
        %863 = vmatprep.mubr.bf16.mxu0 %v365
        %864 = vmatmul.mubr.bf16.gmra.mxu0 %v364
        %v865 = vpop.f32.mrf.mxu0
        %v866 = vadd.f32 %v463, %v865
        %v867 = vpop.f32.mrf.mxu0
        %v868 = vadd.f32 %v467, %v867
        %v869 = vpop.f32.mrf.mxu0
        %v870 = vadd.f32 %v463, %v869
        %v871 = vpop.f32.mrf.mxu0
        %v872 = vadd.f32 %v467, %v871
        %873 = vdwg.mxu0
        %vm874 = vcmp.gt.f32.partialorder %v823, 0.0
        %vm875 = vcmp.gt.f32.partialorder %v825, 0.0
        %vm876 = vcmp.gt.f32.partialorder %v866, 0.0
        %vm877 = vcmp.gt.f32.partialorder %v868, 0.0
        %vm878 = vcmp.gt.f32.partialorder %v827, 0.0
        %vm879 = vcmp.gt.f32.partialorder %v829, 0.0
        %vm880 = vcmp.gt.f32.partialorder %v870, 0.0
        %vm881 = vcmp.gt.f32.partialorder %v872, 0.0
        %v882 = vmul.f32 %v823, 0.2
        %v883 = vmul.f32 %v825, 0.2
        %v884 = vmul.f32 %v866, 0.2
        %v885 = vmul.f32 %v868, 0.2
        %v886 = vmul.f32 %v827, 0.2
        %v887 = vmul.f32 %v829, 0.2
        %v888 = vmul.f32 %v870, 0.2
        %v889 = vmul.f32 %v872, 0.2
        %v890 = vsel %vm874, %v823, %v882
        %v891 = vsel %vm875, %v825, %v883
        %v892 = vsel %vm876, %v866, %v884
        %v893 = vsel %vm877, %v868, %v885
        %v894 = vsel %vm878, %v827, %v886
        %v895 = vsel %vm879, %v829, %v887
        %v896 = vsel %vm880, %v870, %v888
        %v897 = vsel %vm881, %v872, %v889
        %v898 = vpack.c.bf16 %v894, %v890
        %v899 = vpack.c.bf16 %v895, %v891
        %v900 = vpack.c.bf16 %v896, %v892
        %v901 = vpack.c.bf16 %v897, %v893
        %v902 = vld [vmem:[#allocation9] sm:$0xff]
        %v903 = vld [vmem:[#allocation9 + $0x8] sm:$0xff]
        %v904 = vld [vmem:[#allocation9 + $0x10] sm:$0xff]
        %v905 = vld [vmem:[#allocation9 + $0x18] sm:$0xff]
        %v906 = vld [vmem:[#allocation9 + $0x20] sm:$0xff]
        %v907 = vld [vmem:[#allocation9 + $0x28] sm:$0xff]
        %v908 = vld [vmem:[#allocation9 + $0x30] sm:$0xff]
        %v909 = vld [vmem:[#allocation9 + $0x38] sm:$0xff]
        %v910 = vld [vmem:[#allocation9 + $0x40] sm:$0xff]
        %v911 = vld [vmem:[#allocation9 + $0x48] sm:$0xff]
        %v912 = vld [vmem:[#allocation9 + $0x50] sm:$0xff]
        %v913 = vld [vmem:[#allocation9 + $0x58] sm:$0xff]
        %v914 = vld [vmem:[#allocation9 + $0x60] sm:$0xff]
        %v915 = vld [vmem:[#allocation9 + $0x68] sm:$0xff]
        %v916 = vld [vmem:[#allocation9 + $0x70] sm:$0xff]
        %v917 = vld [vmem:[#allocation9 + $0x78] sm:$0xff]
        %v918 = vld [vmem:[#allocation9 + $0x80] sm:$0xff]
        %v919 = vld [vmem:[#allocation9 + $0x88] sm:$0xff]
        %v920 = vld [vmem:[#allocation9 + $0x90] sm:$0xff]
        %v921 = vld [vmem:[#allocation9 + $0x98] sm:$0xff]
        %v922 = vld [vmem:[#allocation9 + $0xa0] sm:$0xff]
        %v923 = vld [vmem:[#allocation9 + $0xa8] sm:$0xff]
        %v924 = vld [vmem:[#allocation9 + $0xb0] sm:$0xff]
        %v925 = vld [vmem:[#allocation9 + $0xb8] sm:$0xff]
        %v926 = vld [vmem:[#allocation9 + $0xc0] sm:$0xff]
        %v927 = vld [vmem:[#allocation9 + $0xc8] sm:$0xff]
        %v928 = vld [vmem:[#allocation9 + $0xd0] sm:$0xff]
        %v929 = vld [vmem:[#allocation9 + $0xd8] sm:$0xff]
        %v930 = vld [vmem:[#allocation9 + $0xe0] sm:$0xff]
        %v931 = vld [vmem:[#allocation9 + $0xe8] sm:$0xff]
        %v932 = vld [vmem:[#allocation9 + $0xf0] sm:$0xff]
        %v933 = vld [vmem:[#allocation9 + $0xf8] sm:$0xff]
        %v934 = vld [vmem:[#allocation9 + $0x100] sm:$0xff]
        %v935 = vld [vmem:[#allocation9 + $0x108] sm:$0xff]
        %v936 = vld [vmem:[#allocation9 + $0x110] sm:$0xff]
        %v937 = vld [vmem:[#allocation9 + $0x118] sm:$0xff]
        %v938 = vld [vmem:[#allocation9 + $0x120] sm:$0xff]
        %v939 = vld [vmem:[#allocation9 + $0x128] sm:$0xff]
        %v940 = vld [vmem:[#allocation9 + $0x130] sm:$0xff]
        %v941 = vld [vmem:[#allocation9 + $0x138] sm:$0xff]
        %v942 = vld [vmem:[#allocation9 + $0x140] sm:$0xff]
        %v943 = vld [vmem:[#allocation9 + $0x148] sm:$0xff]
        %v944 = vld [vmem:[#allocation9 + $0x150] sm:$0xff]
        %v945 = vld [vmem:[#allocation9 + $0x158] sm:$0xff]
        %v946 = vld [vmem:[#allocation9 + $0x160] sm:$0xff]
        %v947 = vld [vmem:[#allocation9 + $0x168] sm:$0xff]
        %v948 = vld [vmem:[#allocation9 + $0x170] sm:$0xff]
        %v949 = vld [vmem:[#allocation9 + $0x178] sm:$0xff]
        %v950 = vld [vmem:[#allocation9 + $0x180] sm:$0xff]
        %v951 = vld [vmem:[#allocation9 + $0x188] sm:$0xff]
        %v952 = vld [vmem:[#allocation9 + $0x190] sm:$0xff]
        %v953 = vld [vmem:[#allocation9 + $0x198] sm:$0xff]
        %v954 = vld [vmem:[#allocation9 + $0x1a0] sm:$0xff]
        %v955 = vld [vmem:[#allocation9 + $0x1a8] sm:$0xff]
        %v956 = vld [vmem:[#allocation9 + $0x1b0] sm:$0xff]
        %v957 = vld [vmem:[#allocation9 + $0x1b8] sm:$0xff]
        %v958 = vld [vmem:[#allocation9 + $0x1c0] sm:$0xff]
        %v959 = vld [vmem:[#allocation9 + $0x1c8] sm:$0xff]
        %v960 = vld [vmem:[#allocation9 + $0x1d0] sm:$0xff]
        %v961 = vld [vmem:[#allocation9 + $0x1d8] sm:$0xff]
        %v962 = vld [vmem:[#allocation9 + $0x1e0] sm:$0xff]
        %v963 = vld [vmem:[#allocation9 + $0x1e8] sm:$0xff]
        %v964 = vld [vmem:[#allocation9 + $0x1f0] sm:$0xff]
        %v965 = vld [vmem:[#allocation9 + $0x1f8] sm:$0xff]
        %v966 = vld [vmem:[#allocation9 + $0x200] sm:$0xff]
        %v967 = vld [vmem:[#allocation9 + $0x208] sm:$0xff]
        %v968 = vld [vmem:[#allocation9 + $0x210] sm:$0xff]
        %v969 = vld [vmem:[#allocation9 + $0x218] sm:$0xff]
        %v970 = vld [vmem:[#allocation9 + $0x220] sm:$0xff]
        %v971 = vld [vmem:[#allocation9 + $0x228] sm:$0xff]
        %v972 = vld [vmem:[#allocation9 + $0x230] sm:$0xff]
        %v973 = vld [vmem:[#allocation9 + $0x238] sm:$0xff]
        %v974 = vld [vmem:[#allocation9 + $0x240] sm:$0xff]
        %v975 = vld [vmem:[#allocation9 + $0x248] sm:$0xff]
        %v976 = vld [vmem:[#allocation9 + $0x250] sm:$0xff]
        %v977 = vld [vmem:[#allocation9 + $0x258] sm:$0xff]
        %v978 = vld [vmem:[#allocation9 + $0x260] sm:$0xff]
        %v979 = vld [vmem:[#allocation9 + $0x268] sm:$0xff]
        %v980 = vld [vmem:[#allocation9 + $0x270] sm:$0xff]
        %v981 = vld [vmem:[#allocation9 + $0x278] sm:$0xff]
        %v982 = vld [vmem:[#allocation9 + $0x280] sm:$0xff]
        %v983 = vld [vmem:[#allocation9 + $0x288] sm:$0xff]
        %v984 = vld [vmem:[#allocation9 + $0x290] sm:$0xff]
        %v985 = vld [vmem:[#allocation9 + $0x298] sm:$0xff]
        %v986 = vld [vmem:[#allocation9 + $0x2a0] sm:$0xff]
        %v987 = vld [vmem:[#allocation9 + $0x2a8] sm:$0xff]
        %v988 = vld [vmem:[#allocation9 + $0x2b0] sm:$0xff]
        %v989 = vld [vmem:[#allocation9 + $0x2b8] sm:$0xff]
        %v990 = vld [vmem:[#allocation9 + $0x2c0] sm:$0xff]
        %v991 = vld [vmem:[#allocation9 + $0x2c8] sm:$0xff]
        %v992 = vld [vmem:[#allocation9 + $0x2d0] sm:$0xff]
        %v993 = vld [vmem:[#allocation9 + $0x2d8] sm:$0xff]
        %v994 = vld [vmem:[#allocation9 + $0x2e0] sm:$0xff]
        %v995 = vld [vmem:[#allocation9 + $0x2e8] sm:$0xff]
        %v996 = vld [vmem:[#allocation9 + $0x2f0] sm:$0xff]
        %v997 = vld [vmem:[#allocation9 + $0x2f8] sm:$0xff]
        %v998 = vld [vmem:[#allocation9 + $0x300] sm:$0xff]
        %v999 = vld [vmem:[#allocation9 + $0x308] sm:$0xff]
        %v1000 = vld [vmem:[#allocation9 + $0x310] sm:$0xff]
        %v1001 = vld [vmem:[#allocation9 + $0x318] sm:$0xff]
        %v1002 = vld [vmem:[#allocation9 + $0x320] sm:$0xff]
        %v1003 = vld [vmem:[#allocation9 + $0x328] sm:$0xff]
        %v1004 = vld [vmem:[#allocation9 + $0x330] sm:$0xff]
        %v1005 = vld [vmem:[#allocation9 + $0x338] sm:$0xff]
        %v1006 = vld [vmem:[#allocation9 + $0x340] sm:$0xff]
        %v1007 = vld [vmem:[#allocation9 + $0x348] sm:$0xff]
        %v1008 = vld [vmem:[#allocation9 + $0x350] sm:$0xff]
        %v1009 = vld [vmem:[#allocation9 + $0x358] sm:$0xff]
        %v1010 = vld [vmem:[#allocation9 + $0x360] sm:$0xff]
        %v1011 = vld [vmem:[#allocation9 + $0x368] sm:$0xff]
        %v1012 = vld [vmem:[#allocation9 + $0x370] sm:$0xff]
        %v1013 = vld [vmem:[#allocation9 + $0x378] sm:$0xff]
        %v1014 = vld [vmem:[#allocation9 + $0x380] sm:$0xff]
        %v1015 = vld [vmem:[#allocation9 + $0x388] sm:$0xff]
        %v1016 = vld [vmem:[#allocation9 + $0x390] sm:$0xff]
        %v1017 = vld [vmem:[#allocation9 + $0x398] sm:$0xff]
        %v1018 = vld [vmem:[#allocation9 + $0x3a0] sm:$0xff]
        %v1019 = vld [vmem:[#allocation9 + $0x3a8] sm:$0xff]
        %v1020 = vld [vmem:[#allocation9 + $0x3b0] sm:$0xff]
        %v1021 = vld [vmem:[#allocation9 + $0x3b8] sm:$0xff]
        %v1022 = vld [vmem:[#allocation9 + $0x3c0] sm:$0xff]
        %v1023 = vld [vmem:[#allocation9 + $0x3c8] sm:$0xff]
        %v1024 = vld [vmem:[#allocation9 + $0x3d0] sm:$0xff]
        %v1025 = vld [vmem:[#allocation9 + $0x3d8] sm:$0xff]
        %v1026 = vld [vmem:[#allocation9 + $0x3e0] sm:$0xff]
        %v1027 = vld [vmem:[#allocation9 + $0x3e8] sm:$0xff]
        %v1028 = vld [vmem:[#allocation9 + $0x3f0] sm:$0xff]
        %v1029 = vld [vmem:[#allocation9 + $0x3f8] sm:$0xff]
        %v1158 = vunpack.c.l.b16 %v902
        %v1159 = vunpack.c.h.b16 %v902
        %v1160 = vunpack.c.l.b16 %v903
        %v1161 = vunpack.c.h.b16 %v903
        %v1162 = vunpack.c.l.b16 %v904
        %v1163 = vunpack.c.h.b16 %v904
        %v1164 = vunpack.c.l.b16 %v905
        %v1165 = vunpack.c.h.b16 %v905
        %v1166 = vunpack.c.l.b16 %v906
        %v1167 = vunpack.c.h.b16 %v906
        %v1168 = vunpack.c.l.b16 %v907
        %v1169 = vunpack.c.h.b16 %v907
        %v1170 = vunpack.c.l.b16 %v908
        %v1171 = vunpack.c.h.b16 %v908
        %v1172 = vunpack.c.l.b16 %v909
        %v1173 = vunpack.c.h.b16 %v909
        %v1174 = vunpack.c.l.b16 %v910
        %v1175 = vunpack.c.h.b16 %v910
        %v1176 = vunpack.c.l.b16 %v911
        %v1177 = vunpack.c.h.b16 %v911
        %v1178 = vunpack.c.l.b16 %v912
        %v1179 = vunpack.c.h.b16 %v912
        %v1180 = vunpack.c.l.b16 %v913
        %v1181 = vunpack.c.h.b16 %v913
        %v1182 = vunpack.c.l.b16 %v914
        %v1183 = vunpack.c.h.b16 %v914
        %v1184 = vunpack.c.l.b16 %v915
        %v1185 = vunpack.c.h.b16 %v915
        %v1186 = vunpack.c.l.b16 %v916
        %v1187 = vunpack.c.h.b16 %v916
        %v1188 = vunpack.c.l.b16 %v917
        %v1189 = vunpack.c.h.b16 %v917
        %v1190 = vunpack.c.l.b16 %v918
        %v1191 = vunpack.c.h.b16 %v918
        %v1192 = vunpack.c.l.b16 %v919
        %v1193 = vunpack.c.h.b16 %v919
        %v1194 = vunpack.c.l.b16 %v920
        %v1195 = vunpack.c.h.b16 %v920
        %v1196 = vunpack.c.l.b16 %v921
        %v1197 = vunpack.c.h.b16 %v921
        %v1198 = vunpack.c.l.b16 %v922
        %v1199 = vunpack.c.h.b16 %v922
        %v1200 = vunpack.c.l.b16 %v923
        %v1201 = vunpack.c.h.b16 %v923
        %v1202 = vunpack.c.l.b16 %v924
        %v1203 = vunpack.c.h.b16 %v924
        %v1204 = vunpack.c.l.b16 %v925
        %v1205 = vunpack.c.h.b16 %v925
        %v1206 = vunpack.c.l.b16 %v926
        %v1207 = vunpack.c.h.b16 %v926
        %v1208 = vunpack.c.l.b16 %v927
        %v1209 = vunpack.c.h.b16 %v927
        %v1210 = vunpack.c.l.b16 %v928
        %v1211 = vunpack.c.h.b16 %v928
        %v1212 = vunpack.c.l.b16 %v929
        %v1213 = vunpack.c.h.b16 %v929
        %v1214 = vunpack.c.l.b16 %v930
        %v1215 = vunpack.c.h.b16 %v930
        %v1216 = vunpack.c.l.b16 %v931
        %v1217 = vunpack.c.h.b16 %v931
        %v1218 = vunpack.c.l.b16 %v932
        %v1219 = vunpack.c.h.b16 %v932
        %v1220 = vunpack.c.l.b16 %v933
        %v1221 = vunpack.c.h.b16 %v933
        %v1222 = vunpack.c.l.b16 %v934
        %v1223 = vunpack.c.h.b16 %v934
        %v1224 = vunpack.c.l.b16 %v935
        %v1225 = vunpack.c.h.b16 %v935
        %v1226 = vunpack.c.l.b16 %v936
        %v1227 = vunpack.c.h.b16 %v936
        %v1228 = vunpack.c.l.b16 %v937
        %v1229 = vunpack.c.h.b16 %v937
        %v1230 = vunpack.c.l.b16 %v938
        %v1231 = vunpack.c.h.b16 %v938
        %v1232 = vunpack.c.l.b16 %v939
        %v1233 = vunpack.c.h.b16 %v939
        %v1234 = vunpack.c.l.b16 %v940
        %v1235 = vunpack.c.h.b16 %v940
        %v1236 = vunpack.c.l.b16 %v941
        %v1237 = vunpack.c.h.b16 %v941
        %v1238 = vunpack.c.l.b16 %v942
        %v1239 = vunpack.c.h.b16 %v942
        %v1240 = vunpack.c.l.b16 %v943
        %v1241 = vunpack.c.h.b16 %v943
        %v1242 = vunpack.c.l.b16 %v944
        %v1243 = vunpack.c.h.b16 %v944
        %v1244 = vunpack.c.l.b16 %v945
        %v1245 = vunpack.c.h.b16 %v945
        %v1246 = vunpack.c.l.b16 %v946
        %v1247 = vunpack.c.h.b16 %v946
        %v1248 = vunpack.c.l.b16 %v947
        %v1249 = vunpack.c.h.b16 %v947
        %v1250 = vunpack.c.l.b16 %v948
        %v1251 = vunpack.c.h.b16 %v948
        %v1252 = vunpack.c.l.b16 %v949
        %v1253 = vunpack.c.h.b16 %v949
        %v1254 = vunpack.c.l.b16 %v950
        %v1255 = vunpack.c.h.b16 %v950
        %v1256 = vunpack.c.l.b16 %v951
        %v1257 = vunpack.c.h.b16 %v951
        %v1258 = vunpack.c.l.b16 %v952
        %v1259 = vunpack.c.h.b16 %v952
        %v1260 = vunpack.c.l.b16 %v953
        %v1261 = vunpack.c.h.b16 %v953
        %v1262 = vunpack.c.l.b16 %v954
        %v1263 = vunpack.c.h.b16 %v954
        %v1264 = vunpack.c.l.b16 %v955
        %v1265 = vunpack.c.h.b16 %v955
        %v1266 = vunpack.c.l.b16 %v956
        %v1267 = vunpack.c.h.b16 %v956
        %v1268 = vunpack.c.l.b16 %v957
        %v1269 = vunpack.c.h.b16 %v957
        %v1270 = vunpack.c.l.b16 %v958
        %v1271 = vunpack.c.h.b16 %v958
        %v1272 = vunpack.c.l.b16 %v959
        %v1273 = vunpack.c.h.b16 %v959
        %v1274 = vunpack.c.l.b16 %v960
        %v1275 = vunpack.c.h.b16 %v960
        %v1276 = vunpack.c.l.b16 %v961
        %v1277 = vunpack.c.h.b16 %v961
        %v1278 = vunpack.c.l.b16 %v962
        %v1279 = vunpack.c.h.b16 %v962
        %v1280 = vunpack.c.l.b16 %v963
        %v1281 = vunpack.c.h.b16 %v963
        %v1282 = vunpack.c.l.b16 %v964
        %v1283 = vunpack.c.h.b16 %v964
        %v1284 = vunpack.c.l.b16 %v965
        %v1285 = vunpack.c.h.b16 %v965
        %v1286 = vunpack.c.l.b16 %v966
        %v1287 = vunpack.c.h.b16 %v966
        %v1288 = vunpack.c.l.b16 %v967
        %v1289 = vunpack.c.h.b16 %v967
        %v1290 = vunpack.c.l.b16 %v968
        %v1291 = vunpack.c.h.b16 %v968
        %v1292 = vunpack.c.l.b16 %v969
        %v1293 = vunpack.c.h.b16 %v969
        %v1294 = vunpack.c.l.b16 %v970
        %v1295 = vunpack.c.h.b16 %v970
        %v1296 = vunpack.c.l.b16 %v971
        %v1297 = vunpack.c.h.b16 %v971
        %v1298 = vunpack.c.l.b16 %v972
        %v1299 = vunpack.c.h.b16 %v972
        %v1300 = vunpack.c.l.b16 %v973
        %v1301 = vunpack.c.h.b16 %v973
        %v1302 = vunpack.c.l.b16 %v974
        %v1303 = vunpack.c.h.b16 %v974
        %v1304 = vunpack.c.l.b16 %v975
        %v1305 = vunpack.c.h.b16 %v975
        %v1306 = vunpack.c.l.b16 %v976
        %v1307 = vunpack.c.h.b16 %v976
        %v1308 = vunpack.c.l.b16 %v977
        %v1309 = vunpack.c.h.b16 %v977
        %v1310 = vunpack.c.l.b16 %v978
        %v1311 = vunpack.c.h.b16 %v978
        %v1312 = vunpack.c.l.b16 %v979
        %v1313 = vunpack.c.h.b16 %v979
        %v1314 = vunpack.c.l.b16 %v980
        %v1315 = vunpack.c.h.b16 %v980
        %v1316 = vunpack.c.l.b16 %v981
        %v1317 = vunpack.c.h.b16 %v981
        %v1318 = vunpack.c.l.b16 %v982
        %v1319 = vunpack.c.h.b16 %v982
        %v1320 = vunpack.c.l.b16 %v983
        %v1321 = vunpack.c.h.b16 %v983
        %v1322 = vunpack.c.l.b16 %v984
        %v1323 = vunpack.c.h.b16 %v984
        %v1324 = vunpack.c.l.b16 %v985
        %v1325 = vunpack.c.h.b16 %v985
        %v1326 = vunpack.c.l.b16 %v986
        %v1327 = vunpack.c.h.b16 %v986
        %v1328 = vunpack.c.l.b16 %v987
        %v1329 = vunpack.c.h.b16 %v987
        %v1330 = vunpack.c.l.b16 %v988
        %v1331 = vunpack.c.h.b16 %v988
        %v1332 = vunpack.c.l.b16 %v989
        %v1333 = vunpack.c.h.b16 %v989
        %v1334 = vunpack.c.l.b16 %v990
        %v1335 = vunpack.c.h.b16 %v990
        %v1336 = vunpack.c.l.b16 %v991
        %v1337 = vunpack.c.h.b16 %v991
        %v1338 = vunpack.c.l.b16 %v992
        %v1339 = vunpack.c.h.b16 %v992
        %v1340 = vunpack.c.l.b16 %v993
        %v1341 = vunpack.c.h.b16 %v993
        %v1342 = vunpack.c.l.b16 %v994
        %v1343 = vunpack.c.h.b16 %v994
        %v1344 = vunpack.c.l.b16 %v995
        %v1345 = vunpack.c.h.b16 %v995
        %v1346 = vunpack.c.l.b16 %v996
        %v1347 = vunpack.c.h.b16 %v996
        %v1348 = vunpack.c.l.b16 %v997
        %v1349 = vunpack.c.h.b16 %v997
        %v1350 = vunpack.c.l.b16 %v998
        %v1351 = vunpack.c.h.b16 %v998
        %v1352 = vunpack.c.l.b16 %v999
        %v1353 = vunpack.c.h.b16 %v999
        %v1354 = vunpack.c.l.b16 %v1000
        %v1355 = vunpack.c.h.b16 %v1000
        %v1356 = vunpack.c.l.b16 %v1001
        %v1357 = vunpack.c.h.b16 %v1001
        %v1358 = vunpack.c.l.b16 %v1002
        %v1359 = vunpack.c.h.b16 %v1002
        %v1360 = vunpack.c.l.b16 %v1003
        %v1361 = vunpack.c.h.b16 %v1003
        %v1362 = vunpack.c.l.b16 %v1004
        %v1363 = vunpack.c.h.b16 %v1004
        %v1364 = vunpack.c.l.b16 %v1005
        %v1365 = vunpack.c.h.b16 %v1005
        %v1366 = vunpack.c.l.b16 %v1006
        %v1367 = vunpack.c.h.b16 %v1006
        %v1368 = vunpack.c.l.b16 %v1007
        %v1369 = vunpack.c.h.b16 %v1007
        %v1370 = vunpack.c.l.b16 %v1008
        %v1371 = vunpack.c.h.b16 %v1008
        %v1372 = vunpack.c.l.b16 %v1009
        %v1373 = vunpack.c.h.b16 %v1009
        %v1374 = vunpack.c.l.b16 %v1010
        %v1375 = vunpack.c.h.b16 %v1010
        %v1376 = vunpack.c.l.b16 %v1011
        %v1377 = vunpack.c.h.b16 %v1011
        %v1378 = vunpack.c.l.b16 %v1012
        %v1379 = vunpack.c.h.b16 %v1012
        %v1380 = vunpack.c.l.b16 %v1013
        %v1381 = vunpack.c.h.b16 %v1013
        %v1382 = vunpack.c.l.b16 %v1014
        %v1383 = vunpack.c.h.b16 %v1014
        %v1384 = vunpack.c.l.b16 %v1015
        %v1385 = vunpack.c.h.b16 %v1015
        %v1386 = vunpack.c.l.b16 %v1016
        %v1387 = vunpack.c.h.b16 %v1016
        %v1388 = vunpack.c.l.b16 %v1017
        %v1389 = vunpack.c.h.b16 %v1017
        %v1390 = vunpack.c.l.b16 %v1018
        %v1391 = vunpack.c.h.b16 %v1018
        %v1392 = vunpack.c.l.b16 %v1019
        %v1393 = vunpack.c.h.b16 %v1019
        %v1394 = vunpack.c.l.b16 %v1020
        %v1395 = vunpack.c.h.b16 %v1020
        %v1396 = vunpack.c.l.b16 %v1021
        %v1397 = vunpack.c.h.b16 %v1021
        %v1398 = vunpack.c.l.b16 %v1022
        %v1399 = vunpack.c.h.b16 %v1022
        %v1400 = vunpack.c.l.b16 %v1023
        %v1401 = vunpack.c.h.b16 %v1023
        %v1402 = vunpack.c.l.b16 %v1024
        %v1403 = vunpack.c.h.b16 %v1024
        %v1404 = vunpack.c.l.b16 %v1025
        %v1405 = vunpack.c.h.b16 %v1025
        %v1406 = vunpack.c.l.b16 %v1026
        %v1407 = vunpack.c.h.b16 %v1026
        %v1408 = vunpack.c.l.b16 %v1027
        %v1409 = vunpack.c.h.b16 %v1027
        %v1410 = vunpack.c.l.b16 %v1028
        %v1411 = vunpack.c.h.b16 %v1028
        %v1412 = vunpack.c.l.b16 %v1029
        %v1413 = vunpack.c.h.b16 %v1029
        %v1414 = vpack.c.b16 %v1162, %v1158
        %v1415 = vpack.c.b16 %v1163, %v1159
        %v1416 = vpack.c.b16 %v1164, %v1160
        %v1417 = vpack.c.b16 %v1165, %v1161
        %v1418 = vpack.c.b16 %v1170, %v1166
        %v1419 = vpack.c.b16 %v1171, %v1167
        %v1420 = vpack.c.b16 %v1172, %v1168
        %v1421 = vpack.c.b16 %v1173, %v1169
        %v1422 = vpack.c.b16 %v1178, %v1174
        %v1423 = vpack.c.b16 %v1179, %v1175
        %v1424 = vpack.c.b16 %v1180, %v1176
        %v1425 = vpack.c.b16 %v1181, %v1177
        %v1426 = vpack.c.b16 %v1186, %v1182
        %v1427 = vpack.c.b16 %v1187, %v1183
        %v1428 = vpack.c.b16 %v1188, %v1184
        %v1429 = vpack.c.b16 %v1189, %v1185
        %v1430 = vpack.c.b16 %v1194, %v1190
        %v1431 = vpack.c.b16 %v1195, %v1191
        %v1432 = vpack.c.b16 %v1196, %v1192
        %v1433 = vpack.c.b16 %v1197, %v1193
        %v1434 = vpack.c.b16 %v1202, %v1198
        %v1435 = vpack.c.b16 %v1203, %v1199
        %v1436 = vpack.c.b16 %v1204, %v1200
        %v1437 = vpack.c.b16 %v1205, %v1201
        %v1438 = vpack.c.b16 %v1210, %v1206
        %v1439 = vpack.c.b16 %v1211, %v1207
        %v1440 = vpack.c.b16 %v1212, %v1208
        %v1441 = vpack.c.b16 %v1213, %v1209
        %v1442 = vpack.c.b16 %v1218, %v1214
        %v1443 = vpack.c.b16 %v1219, %v1215
        %v1444 = vpack.c.b16 %v1220, %v1216
        %v1445 = vpack.c.b16 %v1221, %v1217
        %v1446 = vpack.c.b16 %v1226, %v1222
        %v1447 = vpack.c.b16 %v1227, %v1223
        %v1448 = vpack.c.b16 %v1228, %v1224
        %v1449 = vpack.c.b16 %v1229, %v1225
        %v1450 = vpack.c.b16 %v1234, %v1230
        %v1451 = vpack.c.b16 %v1235, %v1231
        %v1452 = vpack.c.b16 %v1236, %v1232
        %v1453 = vpack.c.b16 %v1237, %v1233
        %v1454 = vpack.c.b16 %v1242, %v1238
        %v1455 = vpack.c.b16 %v1243, %v1239
        %v1456 = vpack.c.b16 %v1244, %v1240
        %v1457 = vpack.c.b16 %v1245, %v1241
        %v1458 = vpack.c.b16 %v1250, %v1246
        %v1459 = vpack.c.b16 %v1251, %v1247
        %v1460 = vpack.c.b16 %v1252, %v1248
        %v1461 = vpack.c.b16 %v1253, %v1249
        %v1462 = vpack.c.b16 %v1258, %v1254
        %v1463 = vpack.c.b16 %v1259, %v1255
        %v1464 = vpack.c.b16 %v1260, %v1256
        %v1465 = vpack.c.b16 %v1261, %v1257
        %v1466 = vpack.c.b16 %v1266, %v1262
        %v1467 = vpack.c.b16 %v1267, %v1263
        %v1468 = vpack.c.b16 %v1268, %v1264
        %v1469 = vpack.c.b16 %v1269, %v1265
        %v1470 = vpack.c.b16 %v1274, %v1270
        %v1471 = vpack.c.b16 %v1275, %v1271
        %v1472 = vpack.c.b16 %v1276, %v1272
        %v1473 = vpack.c.b16 %v1277, %v1273
        %v1474 = vpack.c.b16 %v1282, %v1278
        %v1475 = vpack.c.b16 %v1283, %v1279
        %v1476 = vpack.c.b16 %v1284, %v1280
        %v1477 = vpack.c.b16 %v1285, %v1281
        %v1478 = vpack.c.b16 %v1290, %v1286
        %v1479 = vpack.c.b16 %v1291, %v1287
        %v1480 = vpack.c.b16 %v1292, %v1288
        %v1481 = vpack.c.b16 %v1293, %v1289
        %v1482 = vpack.c.b16 %v1298, %v1294
        %v1483 = vpack.c.b16 %v1299, %v1295
        %v1484 = vpack.c.b16 %v1300, %v1296
        %v1485 = vpack.c.b16 %v1301, %v1297
        %v1486 = vpack.c.b16 %v1306, %v1302
        %v1487 = vpack.c.b16 %v1307, %v1303
        %v1488 = vpack.c.b16 %v1308, %v1304
        %v1489 = vpack.c.b16 %v1309, %v1305
        %v1490 = vpack.c.b16 %v1314, %v1310
        %v1491 = vpack.c.b16 %v1315, %v1311
        %v1492 = vpack.c.b16 %v1316, %v1312
        %v1493 = vpack.c.b16 %v1317, %v1313
        %v1494 = vpack.c.b16 %v1322, %v1318
        %v1495 = vpack.c.b16 %v1323, %v1319
        %v1496 = vpack.c.b16 %v1324, %v1320
        %v1497 = vpack.c.b16 %v1325, %v1321
        %v1498 = vpack.c.b16 %v1330, %v1326
        %v1499 = vpack.c.b16 %v1331, %v1327
        %v1500 = vpack.c.b16 %v1332, %v1328
        %v1501 = vpack.c.b16 %v1333, %v1329
        %v1502 = vpack.c.b16 %v1338, %v1334
        %v1503 = vpack.c.b16 %v1339, %v1335
        %v1504 = vpack.c.b16 %v1340, %v1336
        %v1505 = vpack.c.b16 %v1341, %v1337
        %v1506 = vpack.c.b16 %v1346, %v1342
        %v1507 = vpack.c.b16 %v1347, %v1343
        %v1508 = vpack.c.b16 %v1348, %v1344
        %v1509 = vpack.c.b16 %v1349, %v1345
        %v1510 = vpack.c.b16 %v1354, %v1350
        %v1511 = vpack.c.b16 %v1355, %v1351
        %v1512 = vpack.c.b16 %v1356, %v1352
        %v1513 = vpack.c.b16 %v1357, %v1353
        %v1514 = vpack.c.b16 %v1362, %v1358
        %v1515 = vpack.c.b16 %v1363, %v1359
        %v1516 = vpack.c.b16 %v1364, %v1360
        %v1517 = vpack.c.b16 %v1365, %v1361
        %v1518 = vpack.c.b16 %v1370, %v1366
        %v1519 = vpack.c.b16 %v1371, %v1367
        %v1520 = vpack.c.b16 %v1372, %v1368
        %v1521 = vpack.c.b16 %v1373, %v1369
        %v1522 = vpack.c.b16 %v1378, %v1374
        %v1523 = vpack.c.b16 %v1379, %v1375
        %v1524 = vpack.c.b16 %v1380, %v1376
        %v1525 = vpack.c.b16 %v1381, %v1377
        %v1526 = vpack.c.b16 %v1386, %v1382
        %v1527 = vpack.c.b16 %v1387, %v1383
        %v1528 = vpack.c.b16 %v1388, %v1384
        %v1529 = vpack.c.b16 %v1389, %v1385
        %v1530 = vpack.c.b16 %v1394, %v1390
        %v1531 = vpack.c.b16 %v1395, %v1391
        %v1532 = vpack.c.b16 %v1396, %v1392
        %v1533 = vpack.c.b16 %v1397, %v1393
        %v1534 = vpack.c.b16 %v1402, %v1398
        %v1535 = vpack.c.b16 %v1403, %v1399
        %v1536 = vpack.c.b16 %v1404, %v1400
        %v1537 = vpack.c.b16 %v1405, %v1401
        %v1538 = vpack.c.b16 %v1410, %v1406
        %v1539 = vpack.c.b16 %v1411, %v1407
        %v1540 = vpack.c.b16 %v1412, %v1408
        %v1541 = vpack.c.b16 %v1413, %v1409
        %1670 = vmatprep.subr.bf16.mxu0 %v1443
        %1671 = vmatpush1.bf16.msra.mxu0 %v1442
        %1672 = vmatprep.subr.bf16.mxu0 %v1439
        %1673 = vmatpush1.bf16.msra.mxu0 %v1438
        %1674 = vmatprep.subr.bf16.mxu0 %v1435
        %1675 = vmatpush1.bf16.msra.mxu0 %v1434
        %1676 = vmatprep.subr.bf16.mxu0 %v1431
        %1677 = vmatpush1.bf16.msra.mxu0 %v1430
        %1678 = vmatprep.subr.bf16.mxu0 %v1427
        %1679 = vmatpush1.bf16.msra.mxu0 %v1426
        %1680 = vmatprep.subr.bf16.mxu0 %v1423
        %1681 = vmatpush1.bf16.msra.mxu0 %v1422
        %1682 = vmatprep.subr.bf16.mxu0 %v1419
        %1683 = vmatpush1.bf16.msra.mxu0 %v1418
        %1684 = vmatprep.subr.bf16.mxu0 %v1415
        %1685 = vmatpush1.bf16.msra.mxu0 %v1414
        %1686 = vmatprep.subr.bf16.mxu0 %v1475
        %1687 = vmatpush2.bf16.msra.mxu0 %v1474
        %1688 = vmatprep.subr.bf16.mxu0 %v1471
        %1689 = vmatpush2.bf16.msra.mxu0 %v1470
        %1690 = vmatprep.subr.bf16.mxu0 %v1467
        %1691 = vmatpush2.bf16.msra.mxu0 %v1466
        %1692 = vmatprep.subr.bf16.mxu0 %v1463
        %1693 = vmatpush2.bf16.msra.mxu0 %v1462
        %1694 = vmatprep.subr.bf16.mxu0 %v1459
        %1695 = vmatpush2.bf16.msra.mxu0 %v1458
        %1696 = vmatprep.subr.bf16.mxu0 %v1455
        %1697 = vmatpush2.bf16.msra.mxu0 %v1454
        %1698 = vmatprep.subr.bf16.mxu0 %v1451
        %1699 = vmatpush2.bf16.msra.mxu0 %v1450
        %1700 = vmatprep.subr.bf16.mxu0 %v1447
        %1701 = vmatpush2.bf16.msra.mxu0 %v1446
        %1702 = vmatprep.mubr.bf16.mxu0 %v899
        %1703 = vmatmul.mubr.bf16.gmra.mxu0 %v898
        %v1704 = vpop.f32.mrf.mxu0
        %v1705 = vadd.f32 0.0, %v1704
        %v1706 = vpop.f32.mrf.mxu0
        %v1707 = vadd.f32 0.0, %v1706
        %v1708 = vpop.f32.mrf.mxu0
        %v1709 = vadd.f32 0.0, %v1708
        %v1710 = vpop.f32.mrf.mxu0
        %v1711 = vadd.f32 0.0, %v1710
        %1712 = vdwg.mxu0
        %1713 = vmatprep.subr.bf16.mxu0 %v1507
        %1714 = vmatpush1.bf16.msra.mxu0 %v1506
        %1715 = vmatprep.subr.bf16.mxu0 %v1503
        %1716 = vmatpush1.bf16.msra.mxu0 %v1502
        %1717 = vmatprep.subr.bf16.mxu0 %v1499
        %1718 = vmatpush1.bf16.msra.mxu0 %v1498
        %1719 = vmatprep.subr.bf16.mxu0 %v1495
        %1720 = vmatpush1.bf16.msra.mxu0 %v1494
        %1721 = vmatprep.subr.bf16.mxu0 %v1491
        %1722 = vmatpush1.bf16.msra.mxu0 %v1490
        %1723 = vmatprep.subr.bf16.mxu0 %v1487
        %1724 = vmatpush1.bf16.msra.mxu0 %v1486
        %1725 = vmatprep.subr.bf16.mxu0 %v1483
        %1726 = vmatpush1.bf16.msra.mxu0 %v1482
        %1727 = vmatprep.subr.bf16.mxu0 %v1479
        %1728 = vmatpush1.bf16.msra.mxu0 %v1478
        %1729 = vmatprep.subr.bf16.mxu0 %v1539
        %1730 = vmatpush2.bf16.msra.mxu0 %v1538
        %1731 = vmatprep.subr.bf16.mxu0 %v1535
        %1732 = vmatpush2.bf16.msra.mxu0 %v1534
        %1733 = vmatprep.subr.bf16.mxu0 %v1531
        %1734 = vmatpush2.bf16.msra.mxu0 %v1530
        %1735 = vmatprep.subr.bf16.mxu0 %v1527
        %1736 = vmatpush2.bf16.msra.mxu0 %v1526
        %1737 = vmatprep.subr.bf16.mxu0 %v1523
        %1738 = vmatpush2.bf16.msra.mxu0 %v1522
        %1739 = vmatprep.subr.bf16.mxu0 %v1519
        %1740 = vmatpush2.bf16.msra.mxu0 %v1518
        %1741 = vmatprep.subr.bf16.mxu0 %v1515
        %1742 = vmatpush2.bf16.msra.mxu0 %v1514
        %1743 = vmatprep.subr.bf16.mxu0 %v1511
        %1744 = vmatpush2.bf16.msra.mxu0 %v1510
        %1745 = vmatprep.mubr.bf16.mxu0 %v901
        %1746 = vmatmul.mubr.bf16.gmra.mxu0 %v900
        %v1747 = vpop.f32.mrf.mxu0
        %v1748 = vadd.f32 %v1705, %v1747
        %v1749 = vpop.f32.mrf.mxu0
        %v1750 = vadd.f32 %v1707, %v1749
        %v1751 = vpop.f32.mrf.mxu0
        %v1752 = vadd.f32 %v1709, %v1751
        %v1753 = vpop.f32.mrf.mxu0
        %v1754 = vadd.f32 %v1711, %v1753
        %1755 = vdwg.mxu0
        %1756 = vmatprep.subr.bf16.mxu0 %v1445
        %1757 = vmatpush1.bf16.msra.mxu0 %v1444
        %1758 = vmatprep.subr.bf16.mxu0 %v1441
        %1759 = vmatpush1.bf16.msra.mxu0 %v1440
        %1760 = vmatprep.subr.bf16.mxu0 %v1437
        %1761 = vmatpush1.bf16.msra.mxu0 %v1436
        %1762 = vmatprep.subr.bf16.mxu0 %v1433
        %1763 = vmatpush1.bf16.msra.mxu0 %v1432
        %1764 = vmatprep.subr.bf16.mxu0 %v1429
        %1765 = vmatpush1.bf16.msra.mxu0 %v1428
        %1766 = vmatprep.subr.bf16.mxu0 %v1425
        %1767 = vmatpush1.bf16.msra.mxu0 %v1424
        %1768 = vmatprep.subr.bf16.mxu0 %v1421
        %1769 = vmatpush1.bf16.msra.mxu0 %v1420
        %1770 = vmatprep.subr.bf16.mxu0 %v1417
        %1771 = vmatpush1.bf16.msra.mxu0 %v1416
        %1772 = vmatprep.subr.bf16.mxu0 %v1477
        %1773 = vmatpush2.bf16.msra.mxu0 %v1476
        %1774 = vmatprep.subr.bf16.mxu0 %v1473
        %1775 = vmatpush2.bf16.msra.mxu0 %v1472
        %1776 = vmatprep.subr.bf16.mxu0 %v1469
        %1777 = vmatpush2.bf16.msra.mxu0 %v1468
        %1778 = vmatprep.subr.bf16.mxu0 %v1465
        %1779 = vmatpush2.bf16.msra.mxu0 %v1464
        %1780 = vmatprep.subr.bf16.mxu0 %v1461
        %1781 = vmatpush2.bf16.msra.mxu0 %v1460
        %1782 = vmatprep.subr.bf16.mxu0 %v1457
        %1783 = vmatpush2.bf16.msra.mxu0 %v1456
        %1784 = vmatprep.subr.bf16.mxu0 %v1453
        %1785 = vmatpush2.bf16.msra.mxu0 %v1452
        %1786 = vmatprep.subr.bf16.mxu0 %v1449
        %1787 = vmatpush2.bf16.msra.mxu0 %v1448
        %1788 = vmatprep.mubr.bf16.mxu0 %v899
        %1789 = vmatmul.mubr.bf16.gmra.mxu0 %v898
        %v1790 = vpop.f32.mrf.mxu0
        %v1791 = vadd.f32 0.0, %v1790
        %v1792 = vpop.f32.mrf.mxu0
        %v1793 = vadd.f32 0.0, %v1792
        %v1794 = vpop.f32.mrf.mxu0
        %v1795 = vadd.f32 0.0, %v1794
        %v1796 = vpop.f32.mrf.mxu0
        %v1797 = vadd.f32 0.0, %v1796
        %1798 = vdwg.mxu0
        %1799 = vmatprep.subr.bf16.mxu0 %v1509
        %1800 = vmatpush1.bf16.msra.mxu0 %v1508
        %1801 = vmatprep.subr.bf16.mxu0 %v1505
        %1802 = vmatpush1.bf16.msra.mxu0 %v1504
        %1803 = vmatprep.subr.bf16.mxu0 %v1501
        %1804 = vmatpush1.bf16.msra.mxu0 %v1500
        %1805 = vmatprep.subr.bf16.mxu0 %v1497
        %1806 = vmatpush1.bf16.msra.mxu0 %v1496
        %1807 = vmatprep.subr.bf16.mxu0 %v1493
        %1808 = vmatpush1.bf16.msra.mxu0 %v1492
        %1809 = vmatprep.subr.bf16.mxu0 %v1489
        %1810 = vmatpush1.bf16.msra.mxu0 %v1488
        %1811 = vmatprep.subr.bf16.mxu0 %v1485
        %1812 = vmatpush1.bf16.msra.mxu0 %v1484
        %1813 = vmatprep.subr.bf16.mxu0 %v1481
        %1814 = vmatpush1.bf16.msra.mxu0 %v1480
        %1815 = vmatprep.subr.bf16.mxu0 %v1541
        %1816 = vmatpush2.bf16.msra.mxu0 %v1540
        %1817 = vmatprep.subr.bf16.mxu0 %v1537
        %1818 = vmatpush2.bf16.msra.mxu0 %v1536
        %1819 = vmatprep.subr.bf16.mxu0 %v1533
        %1820 = vmatpush2.bf16.msra.mxu0 %v1532
        %1821 = vmatprep.subr.bf16.mxu0 %v1529
        %1822 = vmatpush2.bf16.msra.mxu0 %v1528
        %1823 = vmatprep.subr.bf16.mxu0 %v1525
        %1824 = vmatpush2.bf16.msra.mxu0 %v1524
        %1825 = vmatprep.subr.bf16.mxu0 %v1521
        %1826 = vmatpush2.bf16.msra.mxu0 %v1520
        %1827 = vmatprep.subr.bf16.mxu0 %v1517
        %1828 = vmatpush2.bf16.msra.mxu0 %v1516
        %1829 = vmatprep.subr.bf16.mxu0 %v1513
        %1830 = vmatpush2.bf16.msra.mxu0 %v1512
        %1831 = vmatprep.mubr.bf16.mxu0 %v901
        %1832 = vmatmul.mubr.bf16.gmra.mxu0 %v900
        %v1833 = vpop.f32.mrf.mxu0
        %v1834 = vadd.f32 %v1791, %v1833
        %v1835 = vpop.f32.mrf.mxu0
        %v1836 = vadd.f32 %v1793, %v1835
        %v1837 = vpop.f32.mrf.mxu0
        %v1838 = vadd.f32 %v1795, %v1837
        %v1839 = vpop.f32.mrf.mxu0
        %v1840 = vadd.f32 %v1797, %v1839
        %1841 = vdwg.mxu0
        %v1842 = vlaneseq
        %v1843 = vshrl.u32 %v1842, 7
        %v1844 = vadd.s32 %v1843, 8
        %s1845 = smul.u32 %s28, 16
        %v1846 = vstv %s1845
        %v1847 = vadd.s32 %v1843, %v1846
        %v1848 = vadd.s32 %v1844, %v1846
        %vm1849 = vcmp.lt.s32.totalorder %v1847, 8
        %vm1850 = vcmp.lt.s32.totalorder %v1848, 8
        %v1851 = vsel %vm1849, 1, 0
        %v1852 = vsel %vm1850, 1, 0
        %vm1853 = vcmp.eq.s32.totalorder %v1851, 1
        %vm1854 = vcmp.eq.s32.totalorder %v1852, 1
        %v1855 = vsel %vm1853, %v1748, 0.0
        %v1856 = vsel %vm1853, %v1750, 0.0
        %v1857 = vsel %vm1853, %v1834, 0.0
        %v1858 = vsel %vm1853, %v1836, 0.0
        %v1859 = vsel %vm1854, %v1752, 0.0
        %v1860 = vsel %vm1854, %v1754, 0.0
        %v1861 = vsel %vm1854, %v1838, 0.0
        %v1862 = vsel %vm1854, %v1840, 0.0
        %p1863 = scmp.eq.s32.totalorder %s27, 0
        // Predicated region
        $region57: #{tpu_custom_call.1} parent=47 // pred_check
          %p1864 = pneg %p1863
        $region58: #{tpu_custom_call.1} parent=47 // pred_check_branch
          %1866 = sbr.rel (%p1864) target = $region60
        $region59: #{tpu_custom_call.1} parent=47 // pred_region
          %p1867 = scmp.eq.s32.totalorder %s28, 0
          // Predicated region
          $region61: #{tpu_custom_call.1} parent=59 // pred_check
            %p1868 = pneg %p1867
          $region62: #{tpu_custom_call.1} parent=59 // pred_check_branch
            %1870 = sbr.rel (%p1868) target = $region64
          $region63: #{tpu_custom_call.1} parent=59 // pred_region
            %v1871 = vlaneseq
            %vm1872 = vcmp.ge.s32.totalorder %v1871, 0
            %vm1873 = vcmp.lt.s32.totalorder %v1871, 512
            %vm1874 = vmand %vm1872, %vm1873
            %1875 = vst.msk [vmem:[#allocation2] sm:$0xf] %vm1874, 0.0
            %1876 = vst.msk [vmem:[#allocation3] sm:$0xf] %vm1874, 0.0
          $region64: #{tpu_custom_call.1} parent=59 // pred_fallthru
            _
          %v1877 = vld [vmem:[#allocation2] sm:$0xf]
          %v1878 = vadd.f32 %v1855, %v1859
          %v1879 = vrot.slane %v1878, 4
          %v1880 = vadd.f32 %v1878, %v1879
          %v1881 = vrot.slane %v1880, 2
          %v1882 = vadd.f32 %v1880, %v1881
          %v1883 = vrot.slane %v1882, 1
          %v1884 = vadd.f32 %v1882, %v1883
          %v1885 = vadd.f32 %v1856, %v1860
          %v1886 = vrot.slane %v1885, 4
          %v1887 = vadd.f32 %v1885, %v1886
          %v1888 = vrot.slane %v1887, 2
          %v1889 = vadd.f32 %v1887, %v1888
          %v1890 = vrot.slane %v1889, 1
          %v1891 = vadd.f32 %v1889, %v1890
          %v1892 = vadd.f32 %v1857, %v1861
          %v1893 = vrot.slane %v1892, 4
          %v1894 = vadd.f32 %v1892, %v1893
          %v1895 = vrot.slane %v1894, 2
          %v1896 = vadd.f32 %v1894, %v1895
          %v1897 = vrot.slane %v1896, 1
          %v1898 = vadd.f32 %v1896, %v1897
          %v1899 = vadd.f32 %v1858, %v1862
          %v1900 = vrot.slane %v1899, 4
          %v1901 = vadd.f32 %v1899, %v1900
          %v1902 = vrot.slane %v1901, 2
          %v1903 = vadd.f32 %v1901, %v1902
          %v1904 = vrot.slane %v1903, 1
          %v1905 = vadd.f32 %v1903, %v1904
          %v1910 = vcombine.low %v1884, %v1891
          %v1911 = vcombine.low %v1898, %v1905
          %v1913 = vunpack.c.l.s4 1966171168
          %v1914 = vunpack.c.0.s8 %v1913
          %v1915 = vlaneseq
          %v1916 = vshrl.u32 %v1915, 7
          %v1917 = vsub.s32 %v1914, %v1916
          %v1918 = vrot.slane %v1910, %v1917
          %v1920 = vunpack.c.l.s4 1966171168
          %v1921 = vunpack.c.0.s8 %v1920
          %v1922 = vlaneseq
          %v1923 = vshrl.u32 %v1922, 7
          %v1924 = vsub.s32 %v1921, %v1923
          %v1925 = vrot.slane %v1911, %v1924
          %v1926 = vcombine.low %v1918, %v1925
          %v1928 = vunpack.c.l.s4 1966171168
          %v1929 = vunpack.c.0.s8 %v1928
          %v1930 = vlaneseq
          %v1931 = vshrl.u32 %v1930, 7
          %v1932 = vsub.s32 %v1929, %v1931
          %v1933 = vrot.slane %v1926, %v1932
          %v1935 = vadd.f32 %v1877, %v1933
          %v1936 = vlaneseq
          %vm1937 = vcmp.ge.s32.totalorder %v1936, 0
          %vm1938 = vcmp.lt.s32.totalorder %v1936, 512
          %vm1939 = vmand %vm1937, %vm1938
          %1940 = vst.msk [vmem:[#allocation2] sm:$0xf] %vm1939, %v1935
          %v1941 = vld [vmem:[#allocation3] sm:$0xf]
          %v1942 = vmul.f32 %v1855, %v1855
          %v1943 = vmul.f32 %v1856, %v1856
          %v1944 = vmul.f32 %v1857, %v1857
          %v1945 = vmul.f32 %v1858, %v1858
          %v1946 = vmul.f32 %v1859, %v1859
          %v1947 = vmul.f32 %v1860, %v1860
          %v1948 = vmul.f32 %v1861, %v1861
          %v1949 = vmul.f32 %v1862, %v1862
          %v1950 = vadd.f32 %v1942, %v1946
          %v1951 = vrot.slane %v1950, 4
          %v1952 = vadd.f32 %v1950, %v1951
          %v1953 = vrot.slane %v1952, 2
          %v1954 = vadd.f32 %v1952, %v1953
          %v1955 = vrot.slane %v1954, 1
          %v1956 = vadd.f32 %v1954, %v1955
          %v1957 = vadd.f32 %v1943, %v1947
          %v1958 = vrot.slane %v1957, 4
          %v1959 = vadd.f32 %v1957, %v1958
          %v1960 = vrot.slane %v1959, 2
          %v1961 = vadd.f32 %v1959, %v1960
          %v1962 = vrot.slane %v1961, 1
          %v1963 = vadd.f32 %v1961, %v1962
          %v1964 = vadd.f32 %v1944, %v1948
          %v1965 = vrot.slane %v1964, 4
          %v1966 = vadd.f32 %v1964, %v1965
          %v1967 = vrot.slane %v1966, 2
          %v1968 = vadd.f32 %v1966, %v1967
          %v1969 = vrot.slane %v1968, 1
          %v1970 = vadd.f32 %v1968, %v1969
          %v1971 = vadd.f32 %v1945, %v1949
          %v1972 = vrot.slane %v1971, 4
          %v1973 = vadd.f32 %v1971, %v1972
          %v1974 = vrot.slane %v1973, 2
          %v1975 = vadd.f32 %v1973, %v1974
          %v1976 = vrot.slane %v1975, 1
          %v1977 = vadd.f32 %v1975, %v1976
          %v1982 = vcombine.low %v1956, %v1963
          %v1983 = vcombine.low %v1970, %v1977
          %v1985 = vunpack.c.l.s4 1966171168
          %v1986 = vunpack.c.0.s8 %v1985
          %v1987 = vlaneseq
          %v1988 = vshrl.u32 %v1987, 7
          %v1989 = vsub.s32 %v1986, %v1988
          %v1990 = vrot.slane %v1982, %v1989
          %v1992 = vunpack.c.l.s4 1966171168
          %v1993 = vunpack.c.0.s8 %v1992
          %v1994 = vlaneseq
          %v1995 = vshrl.u32 %v1994, 7
          %v1996 = vsub.s32 %v1993, %v1995
          %v1997 = vrot.slane %v1983, %v1996
          %v1998 = vcombine.low %v1990, %v1997
          %v2000 = vunpack.c.l.s4 1966171168
          %v2001 = vunpack.c.0.s8 %v2000
          %v2002 = vlaneseq
          %v2003 = vshrl.u32 %v2002, 7
          %v2004 = vsub.s32 %v2001, %v2003
          %v2005 = vrot.slane %v1998, %v2004
          %v2007 = vadd.f32 %v1941, %v2005
          %2008 = vst.msk [vmem:[#allocation3] sm:$0xf] %vm1939, %v2007
        $region60: #{tpu_custom_call.1} parent=47 // pred_fallthru
          _
        %p2009 = scmp.eq.s32.totalorder %s27, 1
        // Predicated region
        $region65: #{tpu_custom_call.1} parent=47 // pred_check
          %p2010 = pneg %p2009
        $region66: #{tpu_custom_call.1} parent=47 // pred_check_branch
          %2012 = sbr.rel (%p2010) target = $region68
        $region67: #{tpu_custom_call.1} parent=47 // pred_region
          %p2013 = scmp.eq.s32.totalorder %s28, 0
          // Predicated region
          $region69: #{tpu_custom_call.1} parent=67 // pred_check
            %p2014 = pneg %p2013
          $region70: #{tpu_custom_call.1} parent=67 // pred_check_branch
            %2016 = sbr.rel (%p2014) target = $region72
          $region71: #{tpu_custom_call.1} parent=67 // pred_region
            %v2017 = vld [vmem:[#allocation2] sm:$0xf]
            %v2018 = vmul.f32 %v2017, 0.125
            %v2019 = vld [vmem:[#allocation3] sm:$0xf]
            %v2020 = vmul.f32 %v2019, 0.125
            %v2021 = vmul.f32 %v2018, %v2018
            %v2022 = vsub.f32 %v2020, %v2021
            %v2023 = vadd.f32 %v2022, 1e-05
            %v2024 = vrsqrt.pop %v2023
            %v2027 = vunpack.c.l.s4 286326784
            %v2028 = vunpack.c.0.s8 %v2027
            %v2029 = vlaneseq
            %v2030 = vshrl.u32 %v2029, 7
            %v2031 = vsub.s32 %v2028, %v2030
            %v2032 = vrot.slane %v2024, %v2031
            %v2034 = vunpack.c.l.s4 858989090
            %v2035 = vunpack.c.0.s8 %v2034
            %v2036 = vlaneseq
            %v2037 = vshrl.u32 %v2036, 7
            %v2038 = vsub.s32 %v2035, %v2037
            %v2039 = vrot.slane %v2024, %v2038
            %v2042 = vmul.f32 %v358, %v2032
            %v2043 = vmul.f32 %v359, %v2039
            %v2047 = vunpack.c.l.s4 1966171168
            %v2048 = vunpack.c.0.s8 %v2047
            %v2049 = vlaneseq
            %v2050 = vshrl.u32 %v2049, 7
            %v2051 = vsub.s32 %v2048, %v2050
            %v2052 = vrot.slane %v2042, %v2051
            %v2054 = vunpack.c.l.s4 1966171168
            %v2055 = vunpack.c.0.s8 %v2054
            %v2056 = vlaneseq
            %v2057 = vshrl.u32 %v2056, 7
            %v2058 = vsub.s32 %v2055, %v2057
            %v2059 = vrot.slane %v2043, %v2058
            %v2060 = vcombine.high %v2052, %v2059
            %v2062 = vunpack.c.l.s4 1966171168
            %v2063 = vunpack.c.0.s8 %v2062
            %v2064 = vlaneseq
            %v2065 = vshrl.u32 %v2064, 7
            %v2066 = vsub.s32 %v2063, %v2065
            %v2067 = vrot.slane %v2060, %v2066
            %v2069 = vlaneseq
            %vm2070 = vcmp.ge.s32.totalorder %v2069, 0
            %vm2071 = vcmp.lt.s32.totalorder %v2069, 512
            %vm2072 = vmand %vm2070, %vm2071
            %2073 = vst.msk [vmem:[#allocation4] sm:$0xf] %vm2072, %v2067
            %v2074 = vmul.f32 %v2018, %v2067
            %v2077 = vunpack.c.l.s4 286326784
            %v2078 = vunpack.c.0.s8 %v2077
            %v2079 = vlaneseq
            %v2080 = vshrl.u32 %v2079, 7
            %v2081 = vsub.s32 %v2078, %v2080
            %v2082 = vrot.slane %v2074, %v2081
            %v2084 = vunpack.c.l.s4 858989090
            %v2085 = vunpack.c.0.s8 %v2084
            %v2086 = vlaneseq
            %v2087 = vshrl.u32 %v2086, 7
            %v2088 = vsub.s32 %v2085, %v2087
            %v2089 = vrot.slane %v2074, %v2088
            %v2092 = vsub.f32 %v358, %v2082
            %v2093 = vsub.f32 %v359, %v2089
            %v2097 = vunpack.c.l.s4 1966171168
            %v2098 = vunpack.c.0.s8 %v2097
            %v2099 = vlaneseq
            %v2100 = vshrl.u32 %v2099, 7
            %v2101 = vsub.s32 %v2098, %v2100
            %v2102 = vrot.slane %v2092, %v2101
            %v2104 = vunpack.c.l.s4 1966171168
            %v2105 = vunpack.c.0.s8 %v2104
            %v2106 = vlaneseq
            %v2107 = vshrl.u32 %v2106, 7
            %v2108 = vsub.s32 %v2105, %v2107
            %v2109 = vrot.slane %v2093, %v2108
            %v2110 = vcombine.low %v2102, %v2109
            %v2112 = vunpack.c.l.s4 1966171168
            %v2113 = vunpack.c.0.s8 %v2112
            %v2114 = vlaneseq
            %v2115 = vshrl.u32 %v2114, 7
            %v2116 = vsub.s32 %v2113, %v2115
            %v2117 = vrot.slane %v2110, %v2116
            %v2118 = vcombine.high %v2117, %v2117
            %2120 = vst.msk [vmem:[#allocation5] sm:$0xf] %vm2072, %v2118
          $region72: #{tpu_custom_call.1} parent=67 // pred_fallthru
            _
          %v2121 = vld [vmem:[#allocation4] sm:$0xf]
          %v2123 = vlaneseq
          %v2124 = vshrl.u32 %v2123, 7
          %v2125 = vsub.s32 0, %v2124
          %v2126 = vrot.slane %v2121, %v2125
          %v2127 = vlaneseq
          %v2128 = vshrl.u32 %v2127, 7
          %v2129 = vsub.s32 1, %v2128
          %v2130 = vrot.slane %v2121, %v2129
          %v2131 = vlaneseq
          %v2132 = vshrl.u32 %v2131, 7
          %v2133 = vsub.s32 2, %v2132
          %v2134 = vrot.slane %v2121, %v2133
          %v2135 = vlaneseq
          %v2136 = vshrl.u32 %v2135, 7
          %v2137 = vsub.s32 3, %v2136
          %v2138 = vrot.slane %v2121, %v2137
          %v2143 = vmul.f32 %v1748, %v2126
          %v2144 = vmul.f32 %v1750, %v2130
          %v2145 = vmul.f32 %v1834, %v2134
          %v2146 = vmul.f32 %v1836, %v2138
          %v2147 = vmul.f32 %v1752, %v2126
          %v2148 = vmul.f32 %v1754, %v2130
          %v2149 = vmul.f32 %v1838, %v2134
          %v2150 = vmul.f32 %v1840, %v2138
          %v2151 = vld [vmem:[#allocation5] sm:$0xf]
          %v2153 = vlaneseq
          %v2154 = vshrl.u32 %v2153, 7
          %v2155 = vsub.s32 0, %v2154
          %v2156 = vrot.slane %v2151, %v2155
          %v2157 = vlaneseq
          %v2158 = vshrl.u32 %v2157, 7
          %v2159 = vsub.s32 1, %v2158
          %v2160 = vrot.slane %v2151, %v2159
          %v2161 = vlaneseq
          %v2162 = vshrl.u32 %v2161, 7
          %v2163 = vsub.s32 2, %v2162
          %v2164 = vrot.slane %v2151, %v2163
          %v2165 = vlaneseq
          %v2166 = vshrl.u32 %v2165, 7
          %v2167 = vsub.s32 3, %v2166
          %v2168 = vrot.slane %v2151, %v2167
          %v2173 = vadd.f32 %v2143, %v2156
          %v2174 = vadd.f32 %v2144, %v2160
          %v2175 = vadd.f32 %v2145, %v2164
          %v2176 = vadd.f32 %v2146, %v2168
          %v2177 = vadd.f32 %v2147, %v2156
          %v2178 = vadd.f32 %v2148, %v2160
          %v2179 = vadd.f32 %v2149, %v2164
          %v2180 = vadd.f32 %v2150, %v2168
          %vm2181 = vcmp.gt.f32.partialorder %v2173, 0.0
          %vm2182 = vcmp.gt.f32.partialorder %v2174, 0.0
          %vm2183 = vcmp.gt.f32.partialorder %v2175, 0.0
          %vm2184 = vcmp.gt.f32.partialorder %v2176, 0.0
          %vm2185 = vcmp.gt.f32.partialorder %v2177, 0.0
          %vm2186 = vcmp.gt.f32.partialorder %v2178, 0.0
          %vm2187 = vcmp.gt.f32.partialorder %v2179, 0.0
          %vm2188 = vcmp.gt.f32.partialorder %v2180, 0.0
          %v2189 = vmul.f32 %v2173, 0.2
          %v2190 = vmul.f32 %v2174, 0.2
          %v2191 = vmul.f32 %v2175, 0.2
          %v2192 = vmul.f32 %v2176, 0.2
          %v2193 = vmul.f32 %v2177, 0.2
          %v2194 = vmul.f32 %v2178, 0.2
          %v2195 = vmul.f32 %v2179, 0.2
          %v2196 = vmul.f32 %v2180, 0.2
          %v2197 = vsel %vm2181, %v2173, %v2189
          %v2198 = vsel %vm2182, %v2174, %v2190
          %v2199 = vsel %vm2183, %v2175, %v2191
          %v2200 = vsel %vm2184, %v2176, %v2192
          %v2201 = vsel %vm2185, %v2177, %v2193
          %v2202 = vsel %vm2186, %v2178, %v2194
          %v2203 = vsel %vm2187, %v2179, %v2195
          %v2204 = vsel %vm2188, %v2180, %v2196
          %v2205 = vpack.c.bf16 %v2201, %v2197
          %v2206 = vpack.c.bf16 %v2202, %v2198
          %v2207 = vpack.c.bf16 %v2203, %v2199
          %v2208 = vpack.c.bf16 %v2204, %v2200
          %v2209 = vld [vmem:[%s4] sm:$0xf]
          %v2210 = vld [vmem:[%s4 + $0x4] sm:$0xf]
          %v2211 = vld [vmem:[%s4 + $0x8] sm:$0xf]
          %v2212 = vld [vmem:[%s4 + $0xc] sm:$0xf]
          %v2213 = vld [vmem:[%s4 + $0x10] sm:$0xf]
          %v2214 = vld [vmem:[%s4 + $0x14] sm:$0xf]
          %v2215 = vld [vmem:[%s4 + $0x18] sm:$0xf]
          %v2216 = vld [vmem:[%s4 + $0x1c] sm:$0xf]
          %v2217 = vld [vmem:[%s4 + $0x20] sm:$0xf]
          %v2218 = vld [vmem:[%s4 + $0x24] sm:$0xf]
          %v2219 = vld [vmem:[%s4 + $0x28] sm:$0xf]
          %v2220 = vld [vmem:[%s4 + $0x2c] sm:$0xf]
          %v2221 = vld [vmem:[%s4 + $0x30] sm:$0xf]
          %v2222 = vld [vmem:[%s4 + $0x34] sm:$0xf]
          %v2223 = vld [vmem:[%s4 + $0x38] sm:$0xf]
          %v2224 = vld [vmem:[%s4 + $0x3c] sm:$0xf]
          %v2225 = vld [vmem:[%s4 + $0x40] sm:$0xf]
          %v2226 = vld [vmem:[%s4 + $0x44] sm:$0xf]
          %v2227 = vld [vmem:[%s4 + $0x48] sm:$0xf]
          %v2228 = vld [vmem:[%s4 + $0x4c] sm:$0xf]
          %v2229 = vld [vmem:[%s4 + $0x50] sm:$0xf]
          %v2230 = vld [vmem:[%s4 + $0x54] sm:$0xf]
          %v2231 = vld [vmem:[%s4 + $0x58] sm:$0xf]
          %v2232 = vld [vmem:[%s4 + $0x5c] sm:$0xf]
          %v2233 = vld [vmem:[%s4 + $0x60] sm:$0xf]
          %v2234 = vld [vmem:[%s4 + $0x64] sm:$0xf]
          %v2235 = vld [vmem:[%s4 + $0x68] sm:$0xf]
          %v2236 = vld [vmem:[%s4 + $0x6c] sm:$0xf]
          %v2237 = vld [vmem:[%s4 + $0x70] sm:$0xf]
          %v2238 = vld [vmem:[%s4 + $0x74] sm:$0xf]
          %v2239 = vld [vmem:[%s4 + $0x78] sm:$0xf]
          %v2240 = vld [vmem:[%s4 + $0x7c] sm:$0xf]
          %v2241 = vld [vmem:[%s4 + $0x80] sm:$0xf]
          %v2242 = vld [vmem:[%s4 + $0x84] sm:$0xf]
          %v2243 = vld [vmem:[%s4 + $0x88] sm:$0xf]
          %v2244 = vld [vmem:[%s4 + $0x8c] sm:$0xf]
          %v2245 = vld [vmem:[%s4 + $0x90] sm:$0xf]
          %v2246 = vld [vmem:[%s4 + $0x94] sm:$0xf]
          %v2247 = vld [vmem:[%s4 + $0x98] sm:$0xf]
          %v2248 = vld [vmem:[%s4 + $0x9c] sm:$0xf]
          %v2249 = vld [vmem:[%s4 + $0xa0] sm:$0xf]
          %v2250 = vld [vmem:[%s4 + $0xa4] sm:$0xf]
          %v2251 = vld [vmem:[%s4 + $0xa8] sm:$0xf]
          %v2252 = vld [vmem:[%s4 + $0xac] sm:$0xf]
          %v2253 = vld [vmem:[%s4 + $0xb0] sm:$0xf]
          %v2254 = vld [vmem:[%s4 + $0xb4] sm:$0xf]
          %v2255 = vld [vmem:[%s4 + $0xb8] sm:$0xf]
          %v2256 = vld [vmem:[%s4 + $0xbc] sm:$0xf]
          %v2257 = vld [vmem:[%s4 + $0xc0] sm:$0xf]
          %v2258 = vld [vmem:[%s4 + $0xc4] sm:$0xf]
          %v2259 = vld [vmem:[%s4 + $0xc8] sm:$0xf]
          %v2260 = vld [vmem:[%s4 + $0xcc] sm:$0xf]
          %v2261 = vld [vmem:[%s4 + $0xd0] sm:$0xf]
          %v2262 = vld [vmem:[%s4 + $0xd4] sm:$0xf]
          %v2263 = vld [vmem:[%s4 + $0xd8] sm:$0xf]
          %v2264 = vld [vmem:[%s4 + $0xdc] sm:$0xf]
          %v2265 = vld [vmem:[%s4 + $0xe0] sm:$0xf]
          %v2266 = vld [vmem:[%s4 + $0xe4] sm:$0xf]
          %v2267 = vld [vmem:[%s4 + $0xe8] sm:$0xf]
          %v2268 = vld [vmem:[%s4 + $0xec] sm:$0xf]
          %v2269 = vld [vmem:[%s4 + $0xf0] sm:$0xf]
          %v2270 = vld [vmem:[%s4 + $0xf4] sm:$0xf]
          %v2271 = vld [vmem:[%s4 + $0xf8] sm:$0xf]
          %v2272 = vld [vmem:[%s4 + $0xfc] sm:$0xf]
          %v2273 = vld [vmem:[%s6] sm:$0x1]
          %v2275 = vlaneseq
          %v2276 = vshrl.u32 %v2275, 7
          %v2277 = vsub.s32 0, %v2276
          %v2278 = vrot.slane %v2273, %v2277
          %v2344 = vunpack.c.l.b16 %v2209
          %v2345 = vunpack.c.l.b16 %v2210
          %v2346 = vunpack.c.l.b16 %v2211
          %v2347 = vunpack.c.l.b16 %v2212
          %v2348 = vunpack.c.l.b16 %v2213
          %v2349 = vunpack.c.l.b16 %v2214
          %v2350 = vunpack.c.l.b16 %v2215
          %v2351 = vunpack.c.l.b16 %v2216
          %v2352 = vunpack.c.l.b16 %v2217
          %v2353 = vunpack.c.l.b16 %v2218
          %v2354 = vunpack.c.l.b16 %v2219
          %v2355 = vunpack.c.l.b16 %v2220
          %v2356 = vunpack.c.l.b16 %v2221
          %v2357 = vunpack.c.l.b16 %v2222
          %v2358 = vunpack.c.l.b16 %v2223
          %v2359 = vunpack.c.l.b16 %v2224
          %v2360 = vunpack.c.l.b16 %v2225
          %v2361 = vunpack.c.l.b16 %v2226
          %v2362 = vunpack.c.l.b16 %v2227
          %v2363 = vunpack.c.l.b16 %v2228
          %v2364 = vunpack.c.l.b16 %v2229
          %v2365 = vunpack.c.l.b16 %v2230
          %v2366 = vunpack.c.l.b16 %v2231
          %v2367 = vunpack.c.l.b16 %v2232
          %v2368 = vunpack.c.l.b16 %v2233
          %v2369 = vunpack.c.l.b16 %v2234
          %v2370 = vunpack.c.l.b16 %v2235
          %v2371 = vunpack.c.l.b16 %v2236
          %v2372 = vunpack.c.l.b16 %v2237
          %v2373 = vunpack.c.l.b16 %v2238
          %v2374 = vunpack.c.l.b16 %v2239
          %v2375 = vunpack.c.l.b16 %v2240
          %v2376 = vunpack.c.l.b16 %v2241
          %v2377 = vunpack.c.l.b16 %v2242
          %v2378 = vunpack.c.l.b16 %v2243
          %v2379 = vunpack.c.l.b16 %v2244
          %v2380 = vunpack.c.l.b16 %v2245
          %v2381 = vunpack.c.l.b16 %v2246
          %v2382 = vunpack.c.l.b16 %v2247
          %v2383 = vunpack.c.l.b16 %v2248
          %v2384 = vunpack.c.l.b16 %v2249
          %v2385 = vunpack.c.l.b16 %v2250
          %v2386 = vunpack.c.l.b16 %v2251
          %v2387 = vunpack.c.l.b16 %v2252
          %v2388 = vunpack.c.l.b16 %v2253
          %v2389 = vunpack.c.l.b16 %v2254
          %v2390 = vunpack.c.l.b16 %v2255
          %v2391 = vunpack.c.l.b16 %v2256
          %v2392 = vunpack.c.l.b16 %v2257
          %v2393 = vunpack.c.l.b16 %v2258
          %v2394 = vunpack.c.l.b16 %v2259
          %v2395 = vunpack.c.l.b16 %v2260
          %v2396 = vunpack.c.l.b16 %v2261
          %v2397 = vunpack.c.l.b16 %v2262
          %v2398 = vunpack.c.l.b16 %v2263
          %v2399 = vunpack.c.l.b16 %v2264
          %v2400 = vunpack.c.l.b16 %v2265
          %v2401 = vunpack.c.l.b16 %v2266
          %v2402 = vunpack.c.l.b16 %v2267
          %v2403 = vunpack.c.l.b16 %v2268
          %v2404 = vunpack.c.l.b16 %v2269
          %v2405 = vunpack.c.l.b16 %v2270
          %v2406 = vunpack.c.l.b16 %v2271
          %v2407 = vunpack.c.l.b16 %v2272
          %v2408 = vpack.c.b16 %v2345, %v2344
          %v2409 = vpack.c.b16 %v2347, %v2346
          %v2410 = vpack.c.b16 %v2349, %v2348
          %v2411 = vpack.c.b16 %v2351, %v2350
          %v2412 = vpack.c.b16 %v2353, %v2352
          %v2413 = vpack.c.b16 %v2355, %v2354
          %v2414 = vpack.c.b16 %v2357, %v2356
          %v2415 = vpack.c.b16 %v2359, %v2358
          %v2416 = vpack.c.b16 %v2361, %v2360
          %v2417 = vpack.c.b16 %v2363, %v2362
          %v2418 = vpack.c.b16 %v2365, %v2364
          %v2419 = vpack.c.b16 %v2367, %v2366
          %v2420 = vpack.c.b16 %v2369, %v2368
          %v2421 = vpack.c.b16 %v2371, %v2370
          %v2422 = vpack.c.b16 %v2373, %v2372
          %v2423 = vpack.c.b16 %v2375, %v2374
          %v2424 = vpack.c.b16 %v2377, %v2376
          %v2425 = vpack.c.b16 %v2379, %v2378
          %v2426 = vpack.c.b16 %v2381, %v2380
          %v2427 = vpack.c.b16 %v2383, %v2382
          %v2428 = vpack.c.b16 %v2385, %v2384
          %v2429 = vpack.c.b16 %v2387, %v2386
          %v2430 = vpack.c.b16 %v2389, %v2388
          %v2431 = vpack.c.b16 %v2391, %v2390
          %v2432 = vpack.c.b16 %v2393, %v2392
          %v2433 = vpack.c.b16 %v2395, %v2394
          %v2434 = vpack.c.b16 %v2397, %v2396
          %v2435 = vpack.c.b16 %v2399, %v2398
          %v2436 = vpack.c.b16 %v2401, %v2400
          %v2437 = vpack.c.b16 %v2403, %v2402
          %v2438 = vpack.c.b16 %v2405, %v2404
          %v2439 = vpack.c.b16 %v2407, %v2406
          %2472 = vmatprep.subr.bf16.mxu0 0
          %2473 = vmatpush1.bf16.msra.mxu0 %v2415
          %2474 = vmatprep.subr.bf16.mxu0 0
          %2475 = vmatpush1.bf16.msra.mxu0 %v2414
          %2476 = vmatprep.subr.bf16.mxu0 0
          %2477 = vmatpush1.bf16.msra.mxu0 %v2413
          %2478 = vmatprep.subr.bf16.mxu0 0
          %2479 = vmatpush1.bf16.msra.mxu0 %v2412
          %2480 = vmatprep.subr.bf16.mxu0 0
          %2481 = vmatpush1.bf16.msra.mxu0 %v2411
          %2482 = vmatprep.subr.bf16.mxu0 0
          %2483 = vmatpush1.bf16.msra.mxu0 %v2410
          %2484 = vmatprep.subr.bf16.mxu0 0
          %2485 = vmatpush1.bf16.msra.mxu0 %v2409
          %2486 = vmatprep.subr.bf16.mxu0 0
          %2487 = vmatpush1.bf16.msra.mxu0 %v2408
          %2488 = vmatprep.subr.bf16.mxu0 0
          %2489 = vmatpush2.bf16.msra.mxu0 %v2423
          %2490 = vmatprep.subr.bf16.mxu0 0
          %2491 = vmatpush2.bf16.msra.mxu0 %v2422
          %2492 = vmatprep.subr.bf16.mxu0 0
          %2493 = vmatpush2.bf16.msra.mxu0 %v2421
          %2494 = vmatprep.subr.bf16.mxu0 0
          %2495 = vmatpush2.bf16.msra.mxu0 %v2420
          %2496 = vmatprep.subr.bf16.mxu0 0
          %2497 = vmatpush2.bf16.msra.mxu0 %v2419
          %2498 = vmatprep.subr.bf16.mxu0 0
          %2499 = vmatpush2.bf16.msra.mxu0 %v2418
          %2500 = vmatprep.subr.bf16.mxu0 0
          %2501 = vmatpush2.bf16.msra.mxu0 %v2417
          %2502 = vmatprep.subr.bf16.mxu0 0
          %2503 = vmatpush2.bf16.msra.mxu0 %v2416
          %2504 = vmatprep.mubr.bf16.mxu0 %v2206
          %2505 = vmatmul.mubr.bf16.gmra.mxu0 %v2205
          %v2506 = vpop.f32.mrf.mxu0
          %v2507 = vadd.f32 %v2278, %v2506
          %v2508 = vpop.f32.mrf.mxu0
          %v2509 = vpop.f32.mrf.mxu0
          %v2510 = vadd.f32 %v2278, %v2509
          %v2511 = vpop.f32.mrf.mxu0
          %2512 = vdwg.mxu0
          %2513 = vmatprep.subr.bf16.mxu0 0
          %2514 = vmatpush1.bf16.msra.mxu0 %v2431
          %2515 = vmatprep.subr.bf16.mxu0 0
          %2516 = vmatpush1.bf16.msra.mxu0 %v2430
          %2517 = vmatprep.subr.bf16.mxu0 0
          %2518 = vmatpush1.bf16.msra.mxu0 %v2429
          %2519 = vmatprep.subr.bf16.mxu0 0
          %2520 = vmatpush1.bf16.msra.mxu0 %v2428
          %2521 = vmatprep.subr.bf16.mxu0 0
          %2522 = vmatpush1.bf16.msra.mxu0 %v2427
          %2523 = vmatprep.subr.bf16.mxu0 0
          %2524 = vmatpush1.bf16.msra.mxu0 %v2426
          %2525 = vmatprep.subr.bf16.mxu0 0
          %2526 = vmatpush1.bf16.msra.mxu0 %v2425
          %2527 = vmatprep.subr.bf16.mxu0 0
          %2528 = vmatpush1.bf16.msra.mxu0 %v2424
          %2529 = vmatprep.subr.bf16.mxu0 0
          %2530 = vmatpush2.bf16.msra.mxu0 %v2439
          %2531 = vmatprep.subr.bf16.mxu0 0
          %2532 = vmatpush2.bf16.msra.mxu0 %v2438
          %2533 = vmatprep.subr.bf16.mxu0 0
          %2534 = vmatpush2.bf16.msra.mxu0 %v2437
          %2535 = vmatprep.subr.bf16.mxu0 0
          %2536 = vmatpush2.bf16.msra.mxu0 %v2436
          %2537 = vmatprep.subr.bf16.mxu0 0
          %2538 = vmatpush2.bf16.msra.mxu0 %v2435
          %2539 = vmatprep.subr.bf16.mxu0 0
          %2540 = vmatpush2.bf16.msra.mxu0 %v2434
          %2541 = vmatprep.subr.bf16.mxu0 0
          %2542 = vmatpush2.bf16.msra.mxu0 %v2433
          %2543 = vmatprep.subr.bf16.mxu0 0
          %2544 = vmatpush2.bf16.msra.mxu0 %v2432
          %2545 = vmatprep.mubr.bf16.mxu0 %v2208
          %2546 = vmatmul.mubr.bf16.gmra.mxu0 %v2207
          %v2547 = vpop.f32.mrf.mxu0
          %v2548 = vadd.f32 %v2507, %v2547
          %v2549 = vpop.f32.mrf.mxu0
          %v2550 = vpop.f32.mrf.mxu0
          %v2551 = vadd.f32 %v2510, %v2550
          %v2552 = vpop.f32.mrf.mxu0
          %2553 = vdwg.mxu0
          %v2554 = vmul.f32 %v2548, 0.5
          %v2555 = vmul.f32 %v2551, 0.5
          %v2556 = vmul.f32 %v2554, 1.442695
          %v2557 = vpow.pop %v2556
          %v2558 = vmul.f32 %v2555, 1.442695
          %v2559 = vpow.pop %v2558
          %v2560 = vld [vmem:[%s352] sm:$0xff]
          %v2561 = vld [vmem:[%s352 + $0x8] sm:$0xff]
          %2564 = vrot.lane.b32.xlu0 %v2557, 96
          %v2565 = vpop.permute.xlu0 %2564
          %2566 = vrot.lane.b32.xlu0 %v2559, 96
          %v2567 = vpop.permute.xlu0 %2566
          %v2570 = vmul.f32 %v2560, %v2565
          %v2571 = vmul.f32 %v2561, %v2567
          %v2572 = vadd.f32 %v2570, %v2548
          %v2573 = vadd.f32 %v2571, %v2551
          %vm2574 = vcmask 261120
          %2575 = vst.msk [vmem:[%s339] sm:$0xff] %vm2574, %v2572
          %2576 = vst.msk [vmem:[%s339 + $0x8] sm:$0xff] %vm2574, %v2573
        $region68: #{tpu_custom_call.1} parent=47 // pred_fallthru
          _
        %s2577 = sand.u32 %s204, 1
        %s2578 = scalar_lea.sflag [#allocation8], %s2577
        %s2579 = sand.u32 %s204, 1
        %s2580 = smul.addr %s2579, 16
        %s2581 = scalar_lea.vmem [#allocation11], %s2580
        // Predicated region
        $region73: #{tpu_custom_call.1} parent=47 // pred_check
          %p2582 = pneg %p214
        $region74: #{tpu_custom_call.1} parent=47 // pred_check_branch
          %2584 = sbr.rel (%p2582) target = $region76
        $region75: #{tpu_custom_call.1} parent=47 // pred_region
          %s2585 = smul.u32 %s27, %s28
          %s2586 = smul.u32 2, %s2585
          %s2588 = ssub.s32 256, 256
          %2589 = vsyncadd %s2578, %s2588
          %s2590 = smul.addr %s2586, 128
          %s2591 = scalar_lea.hbm %s7, %s2590
          %s2592 = sshll.u32 %s2581, 4
          %s2593 = int_to_ptr.vmem [resolvable:$true] %s2592
          %2598 = dma.vmem_to_hbm [thread:$0]  %s2593, 256, %s2591, %s2578, 128, 128, 8
        $region76: #{tpu_custom_call.1} parent=47 // pred_fallthru
          _
      $region48: #{tpu_custom_call.1} parent=5 // pred_fallthru
        _
      %p2599 = scmp.le.s32.totalorder 2, %s18
      // Predicated region
      $region77: #{tpu_custom_call.1} parent=5 // pred_check
        %p2600 = pneg %p2599
      $region78: #{tpu_custom_call.1} parent=5 // pred_check_branch
        %2602 = sbr.rel (%p2600) target = $region80
      $region79: #{tpu_custom_call.1} parent=5 // pred_region
        %s2603 = ssub.s32 %s18, 2
        // Predicated region
        $region81: #{tpu_custom_call.1} parent=79 // pred_check
          %p2604 = pneg %p220
        $region82: #{tpu_custom_call.1} parent=79 // pred_check_branch
          %2606 = sbr.rel (%p2604) target = $region84
        $region83: #{tpu_custom_call.1} parent=79 // pred_region
          %s2607 = sand.u32 %s205, 1
          %s2608 = scalar_lea.sflag [#allocation8], %s2607
          %s2609 = sand.u32 %s205, 1
          %s2610 = smul.addr %s2609, 16
          %s2611 = scalar_lea.vmem [#allocation11], %s2610
          %2612 = dma.done %s2608, 256
        $region84: #{tpu_custom_call.1} parent=79 // pred_fallthru
          _
      $region80: #{tpu_custom_call.1} parent=5 // pred_fallthru
        _
    $region6: #{tpu_custom_call.1} parent=1 // loop_footer
      %s22 = sadd.s32 1, %s18
    $region7: #{tpu_custom_call.1} parent=1 // loop_footer_branch
      %17 = sbr.rel target = $region3
    $region8: #{tpu_custom_call.1} parent=1 // loop_exit
      _
    %2613 = vsyncpa [#allocation7], 1
    %s2614 = scalar_lea.sflag [#allocation7], 1
    %2615 = vsyncpa %s2614, 1
    %2616 = vsyncpa [#allocation10], 1
    %2617 = vsyncpa [#allocation8], 1
    %s2618 = scalar_lea.sflag [#allocation8], 1
    %2619 = vsyncpa %s2618, 1

</llo_original>
